<compile_context>
chip_gen: v7x
topology: tpu7x:2x2x1
jax: 0.10.0
libtpu: 0.0.40
codegen_flags: <defaults>
</compile_context>

<pallas_src>
import jax
import jax.numpy as jnp
from jax.experimental import pallas as pl
from jax.experimental.pallas import tpu as pltpu


# ----------------------------- Pallas kernel --------------------------------

def lstm_mlp_kernel(x_ref, wih_ref, whh_ref, b_ref,
                    w1_ref, b1_ref, w2_ref, b2_ref, o_ref):
    """Fused single-layer LSTM + (Linear -> ReLU -> Linear) head.

    x_ref  : (T*B, D)     time-major, host-flattened padded input
    wih_ref: (D, 4H)      input->gates weight (pre-transposed)
    whh_ref: (H, 4H)      hidden->gates weight (pre-transposed)
    b_ref  : (1, 4H)      combined LSTM bias (b_ih + b_hh)
    w1_ref : (T*H, F1)    first MLP weight (original layout, no reshape)
    b1_ref : (1, F1)
    w2_ref : (F1, OUTP)   second MLP weight, output dim padded to 128 lanes
    b2_ref : (1, OUTP)    padded bias
    o_ref  : (B, OUTP)    lane-dense padded output
    Gate order follows PyTorch: [i, f, g, o].
    """
    TB, D = x_ref.shape
    H = whh_ref.shape[0]
    NH = 4 * H
    B = o_ref.shape[0]
    T = TB // B

    # Hoisted input projection + bias: one (T*B, D) x (D, 4H) matmul instead of
    # one per timestep; the bias broadcast also happens exactly once.
    xw = (jnp.dot(x_ref[...], wih_ref[...],
                  preferred_element_type=jnp.float32)
          + b_ref[...])                                           # (T*B, 4H)

    # Hoisted lane mask + pre-scale selecting the 'g' (tanh) gate lanes [2H, 3H).
    lane = jax.lax.broadcasted_iota(jnp.int32, (B, NH), 1)
    g_mask = (lane >= 2 * H) & (lane < 3 * H)
    gate_scale = jnp.where(g_mask, jnp.float32(2.0), jnp.float32(1.0))

    whh = whh_ref[...]                      # loop-invariant load, hoisted
    h = jnp.zeros((B, H), jnp.float32)
    c = jnp.zeros((B, H), jnp.float32)
    h_steps = []

    # Static unroll: T is a small fixed trip count; h/c and the per-step h_t
    # pieces stay in vregs and all slice indices are static.
    for t in range(T):
        gates = xw[t * B:(t + 1) * B, :] + jnp.dot(
            h, whh, preferred_element_type=jnp.float32)           # (B, 4H)
        # Single EUP pass: sigmoid once over the full 128-lane vreg; the tanh
        # gate is recovered exactly via tanh(x) = 2*sigmoid(2x) - 1.
        s = jax.nn.sigmoid(gates * gate_scale)
        act = jnp.where(g_mask, 2.0 * s - 1.0, s)
        i = act[:, 0 * H:1 * H]
        f = act[:, 1 * H:2 * H]
        g = act[:, 2 * H:3 * H]
        o = act[:, 3 * H:4 * H]
        c = f * c + i * g
        h = o * jnp.tanh(c)
        h_steps.append(h)

    # (B, T*H) vreg-resident slab — matches the reference reduction order and
    # feeds ONE K=T*H matmul against the original W1.
    hs = jnp.concatenate(h_steps, axis=-1)                        # (B, T*H)
    hid = jnp.maximum(
        jnp.dot(hs, w1_ref[...], preferred_element_type=jnp.float32)
        + b1_ref[...], 0.0)                                       # (B, F1)
    out = jnp.dot(hid, w2_ref[...],
                  preferred_element_type=jnp.float32) + b2_ref[...]
    o_ref[...] = out.astype(o_ref.dtype)                          # lane-dense store


# ------------------------------ wrapper --------------------------------------

def _ceil_to(x, m):
    return -(-x // m) * m


def lstm_model(x, params):
    """x: (B, T, D) batch-first, like the PyTorch module."""
    B, T, D = x.shape
    H = params["whh_t"].shape[0]
    OUT = params["w2_t"].shape[1]

    Bp = _ceil_to(B, 8)            # fill a full sublane group
    OUTP = _ceil_to(OUT, 128)      # lane-dense output store

    # Host-side glue (tiny): pad batch, go time-major, flatten, pad W2/b2.
    x_p = jnp.pad(x, ((0, Bp - B), (0, 0), (0, 0)))
    x_flat = jnp.transpose(x_p, (1, 0, 2)).reshape(T * Bp, D)     # (T*Bp, D)
    w2_p = jnp.pad(params["w2_t"], ((0, 0), (0, OUTP - OUT)))
    b2_p = jnp.pad(params["b2"], ((0, 0), (0, OUTP - OUT)))

    out_p = pl.pallas_call(
        lstm_mlp_kernel,
        out_shape=jax.ShapeDtypeStruct((Bp, OUTP), jnp.float32),
        in_specs=[pl.BlockSpec(memory_space=pltpu.MemorySpace.VMEM)] * 8,
        out_specs=pl.BlockSpec(memory_space=pltpu.MemorySpace.VMEM),
    )(x_flat, params["wih_t"], params["whh_t"], params["b_lstm"],
      params["w1_t"], params["b1"], w2_p, b2_p)

    return out_p[:B, :OUT]


# --------------------------- parameter init ----------------------------------

def init_params(key, d_model, hidden, seq_len, final_len):
    """Deterministic synthetic parameters (PyTorch-style uniform init)."""
    ks = jax.random.split(key, 8)
    lstm_bound = 1.0 / jnp.sqrt(hidden)
    wih_t = jax.random.uniform(ks[0], (d_model, 4 * hidden), jnp.float32,
                               -lstm_bound, lstm_bound)
    whh_t = jax.random.uniform(ks[1], (hidden, 4 * hidden), jnp.float32,
                               -lstm_bound, lstm_bound)
    b_ih = jax.random.uniform(ks[2], (1, 4 * hidden), jnp.float32,
                              -lstm_bound, lstm_bound)
    b_hh = jax.random.uniform(ks[3], (1, 4 * hidden), jnp.float32,
                              -lstm_bound, lstm_bound)

    in1 = hidden * seq_len
    b1_bound = 1.0 / jnp.sqrt(in1)
    w1_t = jax.random.uniform(ks[4], (in1, 512), jnp.float32, -b1_bound, b1_bound)
    b1 = jax.random.uniform(ks[5], (1, 512), jnp.float32, -b1_bound, b1_bound)
    b2_bound = 1.0 / jnp.sqrt(512)
    w2_t = jax.random.uniform(ks[6], (512, final_len), jnp.float32,
                              -b2_bound, b2_bound)
    b2 = jax.random.uniform(ks[7], (1, final_len), jnp.float32,
                            -b2_bound, b2_bound)
    return dict(wih_t=wih_t, whh_t=whh_t, b_lstm=b_ih + b_hh,
                w1_t=w1_t, b1=b1, w2_t=w2_t, b2=b2)


# ------------------------- pure-JAX reference ---------------------------------

def reference_model(x, params):
    B, T, _ = x.shape
    H = params["whh_t"].shape[0]
    h = jnp.zeros((B, H), jnp.float32)
    c = jnp.zeros((B, H), jnp.float32)

    def step(carry, x_t):
        h, c = carry
        gates = x_t @ params["wih_t"] + h @ params["whh_t"] + params["b_lstm"]
        i = jax.nn.sigmoid(gates[:, 0 * H:1 * H])
        f = jax.nn.sigmoid(gates[:, 1 * H:2 * H])
        g = jnp.tanh(gates[:, 2 * H:3 * H])
        o = jax.nn.sigmoid(gates[:, 3 * H:4 * H])
        c = f * c + i * g
        h = o * jnp.tanh(c)
        return (h, c), h

    _, hs_tm = jax.lax.scan(step, (h, c), jnp.transpose(x, (1, 0, 2)))
    hs = jnp.transpose(hs_tm, (1, 0, 2)).reshape(B, T * H)
    hid = jnp.maximum(hs @ params["w1_t"] + params["b1"], 0.0)
    return hid @ params["w2_t"] + params["b2"]


# --------------------------------- main ---------------------------------------

if __name__ == "__main__":
    # Small shapes consistent with the module: lstm(seq_len=8, ini_len=18, final_len=1)
    B, T, D, H, FINAL = 2, 8, 18, 32, 1

    key = jax.random.PRNGKey(0)
    k_x, k_p = jax.random.split(key)
    x = jax.random.normal(k_x, (B, T, D), jnp.float32)
    params = init_params(k_p, D, H, T, FINAL)

    out = jax.block_until_ready(jax.jit(lstm_model)(x, params))
    ref = jax.block_until_ready(reference_model(x, params))

    assert out.shape == (B, FINAL), out.shape
    assert jnp.allclose(out, ref, rtol=1e-3, atol=1e-3), (out, ref)
    print("KERNEL_OK")
</pallas_src>

<mosaic_0001>
module attributes {stable_mosaic.version = 11 : i64} {
  func.func @lstm_mlp_kernel(%arg0: memref<64x18xf32, #tpu.memory_space<vmem>>, %arg1: memref<18x128xf32, #tpu.memory_space<vmem>>, %arg2: memref<32x128xf32, #tpu.memory_space<vmem>>, %arg3: memref<1x128xf32, #tpu.memory_space<vmem>>, %arg4: memref<256x512xf32, #tpu.memory_space<vmem>>, %arg5: memref<1x512xf32, #tpu.memory_space<vmem>>, %arg6: memref<512x128xf32, #tpu.memory_space<vmem>>, %arg7: memref<1x128xf32, #tpu.memory_space<vmem>>, %arg8: memref<8x128xf32, #tpu.memory_space<vmem>>) attributes {dimension_semantics = [], scalar_prefetch = 0 : i64, scratch_operands = 0 : i64, tpu.core_type = #tpu.core_type<tc>} {
    %c0 = arith.constant 0 : index
    %c0_0 = arith.constant 0 : index
    %0 = vector.load %arg0[%c0, %c0_0] : memref<64x18xf32, #tpu.memory_space<vmem>>, vector<64x18xf32>
    %c0_1 = arith.constant 0 : index
    %c0_2 = arith.constant 0 : index
    %1 = vector.load %arg1[%c0_1, %c0_2] : memref<18x128xf32, #tpu.memory_space<vmem>>, vector<18x128xf32>
    %cst = arith.constant dense<0.000000e+00> : vector<64x128xf32>
    %2 = tpu.matmul %0, %1, %cst {dimension_numbers = #tpu.dot_dimension_numbers<[1], [0], [0], [1], [0, 0, 1, 1], [], []>} : vector<64x18xf32>, vector<18x128xf32>, vector<64x128xf32> -> vector<64x128xf32>
    %c0_3 = arith.constant 0 : index
    %c0_4 = arith.constant 0 : index
    %3 = vector.load %arg3[%c0_3, %c0_4] : memref<1x128xf32, #tpu.memory_space<vmem>>, vector<1x128xf32>
    %4 = vector.broadcast %3 : vector<1x128xf32> to vector<64x128xf32>
    %5 = arith.addf %2, %4 : vector<64x128xf32>
    %6 = tpu.iota {dimensions = array<i32: 1>} : vector<8x128xi32>
    %c64_i32 = arith.constant 64 : i32
    %7 = vector.broadcast %c64_i32 : i32 to vector<8x128xi32>
    %8 = arith.cmpi sge, %6, %7 : vector<8x128xi32>
    %c96_i32 = arith.constant 96 : i32
    %9 = vector.broadcast %c96_i32 : i32 to vector<8x128xi32>
    %10 = arith.cmpi slt, %6, %9 : vector<8x128xi32>
    %11 = arith.andi %8, %10 : vector<8x128xi1>
    %cst_5 = arith.constant 2.000000e+00 : f32
    %cst_6 = arith.constant 1.000000e+00 : f32
    %12 = vector.broadcast %cst_5 : f32 to vector<8x128xf32>
    %13 = vector.broadcast %cst_6 : f32 to vector<8x128xf32>
    %14 = arith.select %11, %12, %13 : vector<8x128xi1>, vector<8x128xf32>
    %c0_7 = arith.constant 0 : index
    %c0_8 = arith.constant 0 : index
    %15 = vector.load %arg2[%c0_7, %c0_8] : memref<32x128xf32, #tpu.memory_space<vmem>>, vector<32x128xf32>
    %cst_9 = arith.constant 0.000000e+00 : f32
    %16 = vector.broadcast %cst_9 : f32 to vector<8x32xf32>
    %cst_10 = arith.constant 0.000000e+00 : f32
    %17 = vector.broadcast %cst_10 : f32 to vector<8x32xf32>
    %18 = vector.extract_strided_slice %5 {offsets = [0, 0], sizes = [8, 128], strides = [1, 1]} : vector<64x128xf32> to vector<8x128xf32>
    %cst_11 = arith.constant dense<0.000000e+00> : vector<8x128xf32>
    %19 = tpu.matmul %16, %15, %cst_11 {dimension_numbers = #tpu.dot_dimension_numbers<[1], [0], [0], [1], [0, 0, 1, 1], [], []>} : vector<8x32xf32>, vector<32x128xf32>, vector<8x128xf32> -> vector<8x128xf32>
    %20 = arith.addf %18, %19 : vector<8x128xf32>
    %21 = arith.mulf %20, %14 : vector<8x128xf32>
    %22 = arith.negf %21 : vector<8x128xf32>
    %23 = math.exp %22 : vector<8x128xf32>
    %cst_12 = arith.constant 1.000000e+00 : f32
    %24 = vector.broadcast %cst_12 : f32 to vector<8x128xf32>
    %25 = arith.addf %24, %23 : vector<8x128xf32>
    %26 = arith.divf %24, %25 : vector<8x128xf32>
    %cst_13 = arith.constant 2.000000e+00 : f32
    %27 = vector.broadcast %cst_13 : f32 to vector<8x128xf32>
    %28 = arith.mulf %27, %26 : vector<8x128xf32>
    %cst_14 = arith.constant 1.000000e+00 : f32
    %29 = vector.broadcast %cst_14 : f32 to vector<8x128xf32>
    %30 = arith.subf %28, %29 : vector<8x128xf32>
    %31 = arith.select %11, %30, %26 : vector<8x128xi1>, vector<8x128xf32>
    %32 = vector.extract_strided_slice %31 {offsets = [0, 0], sizes = [8, 32], strides = [1, 1]} : vector<8x128xf32> to vector<8x32xf32>
    %33 = vector.extract_strided_slice %31 {offsets = [0, 32], sizes = [8, 32], strides = [1, 1]} : vector<8x128xf32> to vector<8x32xf32>
    %34 = vector.extract_strided_slice %31 {offsets = [0, 64], sizes = [8, 32], strides = [1, 1]} : vector<8x128xf32> to vector<8x32xf32>
    %35 = vector.extract_strided_slice %31 {offsets = [0, 96], sizes = [8, 32], strides = [1, 1]} : vector<8x128xf32> to vector<8x32xf32>
    %36 = arith.mulf %33, %17 : vector<8x32xf32>
    %37 = arith.mulf %32, %34 : vector<8x32xf32>
    %38 = arith.addf %36, %37 : vector<8x32xf32>
    %39 = math.tanh %38 : vector<8x32xf32>
    %40 = arith.mulf %35, %39 : vector<8x32xf32>
    %41 = vector.extract_strided_slice %5 {offsets = [8, 0], sizes = [8, 128], strides = [1, 1]} : vector<64x128xf32> to vector<8x128xf32>
    %cst_15 = arith.constant dense<0.000000e+00> : vector<8x128xf32>
    %42 = tpu.matmul %40, %15, %cst_15 {dimension_numbers = #tpu.dot_dimension_numbers<[1], [0], [0], [1], [0, 0, 1, 1], [], []>} : vector<8x32xf32>, vector<32x128xf32>, vector<8x128xf32> -> vector<8x128xf32>
    %43 = arith.addf %41, %42 : vector<8x128xf32>
    %44 = arith.mulf %43, %14 : vector<8x128xf32>
    %45 = arith.negf %44 : vector<8x128xf32>
    %46 = math.exp %45 : vector<8x128xf32>
    %cst_16 = arith.constant 1.000000e+00 : f32
    %47 = vector.broadcast %cst_16 : f32 to vector<8x128xf32>
    %48 = arith.addf %47, %46 : vector<8x128xf32>
    %49 = arith.divf %47, %48 : vector<8x128xf32>
    %cst_17 = arith.constant 2.000000e+00 : f32
    %50 = vector.broadcast %cst_17 : f32 to vector<8x128xf32>
    %51 = arith.mulf %50, %49 : vector<8x128xf32>
    %cst_18 = arith.constant 1.000000e+00 : f32
    %52 = vector.broadcast %cst_18 : f32 to vector<8x128xf32>
    %53 = arith.subf %51, %52 : vector<8x128xf32>
    %54 = arith.select %11, %53, %49 : vector<8x128xi1>, vector<8x128xf32>
    %55 = vector.extract_strided_slice %54 {offsets = [0, 0], sizes = [8, 32], strides = [1, 1]} : vector<8x128xf32> to vector<8x32xf32>
    %56 = vector.extract_strided_slice %54 {offsets = [0, 32], sizes = [8, 32], strides = [1, 1]} : vector<8x128xf32> to vector<8x32xf32>
    %57 = vector.extract_strided_slice %54 {offsets = [0, 64], sizes = [8, 32], strides = [1, 1]} : vector<8x128xf32> to vector<8x32xf32>
    %58 = vector.extract_strided_slice %54 {offsets = [0, 96], sizes = [8, 32], strides = [1, 1]} : vector<8x128xf32> to vector<8x32xf32>
    %59 = arith.mulf %56, %38 : vector<8x32xf32>
    %60 = arith.mulf %55, %57 : vector<8x32xf32>
    %61 = arith.addf %59, %60 : vector<8x32xf32>
    %62 = math.tanh %61 : vector<8x32xf32>
    %63 = arith.mulf %58, %62 : vector<8x32xf32>
    %64 = vector.extract_strided_slice %5 {offsets = [16, 0], sizes = [8, 128], strides = [1, 1]} : vector<64x128xf32> to vector<8x128xf32>
    %cst_19 = arith.constant dense<0.000000e+00> : vector<8x128xf32>
    %65 = tpu.matmul %63, %15, %cst_19 {dimension_numbers = #tpu.dot_dimension_numbers<[1], [0], [0], [1], [0, 0, 1, 1], [], []>} : vector<8x32xf32>, vector<32x128xf32>, vector<8x128xf32> -> vector<8x128xf32>
    %66 = arith.addf %64, %65 : vector<8x128xf32>
    %67 = arith.mulf %66, %14 : vector<8x128xf32>
    %68 = arith.negf %67 : vector<8x128xf32>
    %69 = math.exp %68 : vector<8x128xf32>
    %cst_20 = arith.constant 1.000000e+00 : f32
    %70 = vector.broadcast %cst_20 : f32 to vector<8x128xf32>
    %71 = arith.addf %70, %69 : vector<8x128xf32>
    %72 = arith.divf %70, %71 : vector<8x128xf32>
    %cst_21 = arith.constant 2.000000e+00 : f32
    %73 = vector.broadcast %cst_21 : f32 to vector<8x128xf32>
    %74 = arith.mulf %73, %72 : vector<8x128xf32>
    %cst_22 = arith.constant 1.000000e+00 : f32
    %75 = vector.broadcast %cst_22 : f32 to vector<8x128xf32>
    %76 = arith.subf %74, %75 : vector<8x128xf32>
    %77 = arith.select %11, %76, %72 : vector<8x128xi1>, vector<8x128xf32>
    %78 = vector.extract_strided_slice %77 {offsets = [0, 0], sizes = [8, 32], strides = [1, 1]} : vector<8x128xf32> to vector<8x32xf32>
    %79 = vector.extract_strided_slice %77 {offsets = [0, 32], sizes = [8, 32], strides = [1, 1]} : vector<8x128xf32> to vector<8x32xf32>
    %80 = vector.extract_strided_slice %77 {offsets = [0, 64], sizes = [8, 32], strides = [1, 1]} : vector<8x128xf32> to vector<8x32xf32>
    %81 = vector.extract_strided_slice %77 {offsets = [0, 96], sizes = [8, 32], strides = [1, 1]} : vector<8x128xf32> to vector<8x32xf32>
    %82 = arith.mulf %79, %61 : vector<8x32xf32>
    %83 = arith.mulf %78, %80 : vector<8x32xf32>
    %84 = arith.addf %82, %83 : vector<8x32xf32>
    %85 = math.tanh %84 : vector<8x32xf32>
    %86 = arith.mulf %81, %85 : vector<8x32xf32>
    %87 = vector.extract_strided_slice %5 {offsets = [24, 0], sizes = [8, 128], strides = [1, 1]} : vector<64x128xf32> to vector<8x128xf32>
    %cst_23 = arith.constant dense<0.000000e+00> : vector<8x128xf32>
    %88 = tpu.matmul %86, %15, %cst_23 {dimension_numbers = #tpu.dot_dimension_numbers<[1], [0], [0], [1], [0, 0, 1, 1], [], []>} : vector<8x32xf32>, vector<32x128xf32>, vector<8x128xf32> -> vector<8x128xf32>
    %89 = arith.addf %87, %88 : vector<8x128xf32>
    %90 = arith.mulf %89, %14 : vector<8x128xf32>
    %91 = arith.negf %90 : vector<8x128xf32>
    %92 = math.exp %91 : vector<8x128xf32>
    %cst_24 = arith.constant 1.000000e+00 : f32
    %93 = vector.broadcast %cst_24 : f32 to vector<8x128xf32>
    %94 = arith.addf %93, %92 : vector<8x128xf32>
    %95 = arith.divf %93, %94 : vector<8x128xf32>
    %cst_25 = arith.constant 2.000000e+00 : f32
    %96 = vector.broadcast %cst_25 : f32 to vector<8x128xf32>
    %97 = arith.mulf %96, %95 : vector<8x128xf32>
    %cst_26 = arith.constant 1.000000e+00 : f32
    %98 = vector.broadcast %cst_26 : f32 to vector<8x128xf32>
    %99 = arith.subf %97, %98 : vector<8x128xf32>
    %100 = arith.select %11, %99, %95 : vector<8x128xi1>, vector<8x128xf32>
    %101 = vector.extract_strided_slice %100 {offsets = [0, 0], sizes = [8, 32], strides = [1, 1]} : vector<8x128xf32> to vector<8x32xf32>
    %102 = vector.extract_strided_slice %100 {offsets = [0, 32], sizes = [8, 32], strides = [1, 1]} : vector<8x128xf32> to vector<8x32xf32>
    %103 = vector.extract_strided_slice %100 {offsets = [0, 64], sizes = [8, 32], strides = [1, 1]} : vector<8x128xf32> to vector<8x32xf32>
    %104 = vector.extract_strided_slice %100 {offsets = [0, 96], sizes = [8, 32], strides = [1, 1]} : vector<8x128xf32> to vector<8x32xf32>
    %105 = arith.mulf %102, %84 : vector<8x32xf32>
    %106 = arith.mulf %101, %103 : vector<8x32xf32>
    %107 = arith.addf %105, %106 : vector<8x32xf32>
    %108 = math.tanh %107 : vector<8x32xf32>
    %109 = arith.mulf %104, %108 : vector<8x32xf32>
    %110 = vector.extract_strided_slice %5 {offsets = [32, 0], sizes = [8, 128], strides = [1, 1]} : vector<64x128xf32> to vector<8x128xf32>
    %cst_27 = arith.constant dense<0.000000e+00> : vector<8x128xf32>
    %111 = tpu.matmul %109, %15, %cst_27 {dimension_numbers = #tpu.dot_dimension_numbers<[1], [0], [0], [1], [0, 0, 1, 1], [], []>} : vector<8x32xf32>, vector<32x128xf32>, vector<8x128xf32> -> vector<8x128xf32>
    %112 = arith.addf %110, %111 : vector<8x128xf32>
    %113 = arith.mulf %112, %14 : vector<8x128xf32>
    %114 = arith.negf %113 : vector<8x128xf32>
    %115 = math.exp %114 : vector<8x128xf32>
    %cst_28 = arith.constant 1.000000e+00 : f32
    %116 = vector.broadcast %cst_28 : f32 to vector<8x128xf32>
    %117 = arith.addf %116, %115 : vector<8x128xf32>
    %118 = arith.divf %116, %117 : vector<8x128xf32>
    %cst_29 = arith.constant 2.000000e+00 : f32
    %119 = vector.broadcast %cst_29 : f32 to vector<8x128xf32>
    %120 = arith.mulf %119, %118 : vector<8x128xf32>
    %cst_30 = arith.constant 1.000000e+00 : f32
    %121 = vector.broadcast %cst_30 : f32 to vector<8x128xf32>
    %122 = arith.subf %120, %121 : vector<8x128xf32>
    %123 = arith.select %11, %122, %118 : vector<8x128xi1>, vector<8x128xf32>
    %124 = vector.extract_strided_slice %123 {offsets = [0, 0], sizes = [8, 32], strides = [1, 1]} : vector<8x128xf32> to vector<8x32xf32>
    %125 = vector.extract_strided_slice %123 {offsets = [0, 32], sizes = [8, 32], strides = [1, 1]} : vector<8x128xf32> to vector<8x32xf32>
    %126 = vector.extract_strided_slice %123 {offsets = [0, 64], sizes = [8, 32], strides = [1, 1]} : vector<8x128xf32> to vector<8x32xf32>
    %127 = vector.extract_strided_slice %123 {offsets = [0, 96], sizes = [8, 32], strides = [1, 1]} : vector<8x128xf32> to vector<8x32xf32>
    %128 = arith.mulf %125, %107 : vector<8x32xf32>
    %129 = arith.mulf %124, %126 : vector<8x32xf32>
    %130 = arith.addf %128, %129 : vector<8x32xf32>
    %131 = math.tanh %130 : vector<8x32xf32>
    %132 = arith.mulf %127, %131 : vector<8x32xf32>
    %133 = vector.extract_strided_slice %5 {offsets = [40, 0], sizes = [8, 128], strides = [1, 1]} : vector<64x128xf32> to vector<8x128xf32>
    %cst_31 = arith.constant dense<0.000000e+00> : vector<8x128xf32>
    %134 = tpu.matmul %132, %15, %cst_31 {dimension_numbers = #tpu.dot_dimension_numbers<[1], [0], [0], [1], [0, 0, 1, 1], [], []>} : vector<8x32xf32>, vector<32x128xf32>, vector<8x128xf32> -> vector<8x128xf32>
    %135 = arith.addf %133, %134 : vector<8x128xf32>
    %136 = arith.mulf %135, %14 : vector<8x128xf32>
    %137 = arith.negf %136 : vector<8x128xf32>
    %138 = math.exp %137 : vector<8x128xf32>
    %cst_32 = arith.constant 1.000000e+00 : f32
    %139 = vector.broadcast %cst_32 : f32 to vector<8x128xf32>
    %140 = arith.addf %139, %138 : vector<8x128xf32>
    %141 = arith.divf %139, %140 : vector<8x128xf32>
    %cst_33 = arith.constant 2.000000e+00 : f32
    %142 = vector.broadcast %cst_33 : f32 to vector<8x128xf32>
    %143 = arith.mulf %142, %141 : vector<8x128xf32>
    %cst_34 = arith.constant 1.000000e+00 : f32
    %144 = vector.broadcast %cst_34 : f32 to vector<8x128xf32>
    %145 = arith.subf %143, %144 : vector<8x128xf32>
    %146 = arith.select %11, %145, %141 : vector<8x128xi1>, vector<8x128xf32>
    %147 = vector.extract_strided_slice %146 {offsets = [0, 0], sizes = [8, 32], strides = [1, 1]} : vector<8x128xf32> to vector<8x32xf32>
    %148 = vector.extract_strided_slice %146 {offsets = [0, 32], sizes = [8, 32], strides = [1, 1]} : vector<8x128xf32> to vector<8x32xf32>
    %149 = vector.extract_strided_slice %146 {offsets = [0, 64], sizes = [8, 32], strides = [1, 1]} : vector<8x128xf32> to vector<8x32xf32>
    %150 = vector.extract_strided_slice %146 {offsets = [0, 96], sizes = [8, 32], strides = [1, 1]} : vector<8x128xf32> to vector<8x32xf32>
    %151 = arith.mulf %148, %130 : vector<8x32xf32>
    %152 = arith.mulf %147, %149 : vector<8x32xf32>
    %153 = arith.addf %151, %152 : vector<8x32xf32>
    %154 = math.tanh %153 : vector<8x32xf32>
    %155 = arith.mulf %150, %154 : vector<8x32xf32>
    %156 = vector.extract_strided_slice %5 {offsets = [48, 0], sizes = [8, 128], strides = [1, 1]} : vector<64x128xf32> to vector<8x128xf32>
    %cst_35 = arith.constant dense<0.000000e+00> : vector<8x128xf32>
    %157 = tpu.matmul %155, %15, %cst_35 {dimension_numbers = #tpu.dot_dimension_numbers<[1], [0], [0], [1], [0, 0, 1, 1], [], []>} : vector<8x32xf32>, vector<32x128xf32>, vector<8x128xf32> -> vector<8x128xf32>
    %158 = arith.addf %156, %157 : vector<8x128xf32>
    %159 = arith.mulf %158, %14 : vector<8x128xf32>
    %160 = arith.negf %159 : vector<8x128xf32>
    %161 = math.exp %160 : vector<8x128xf32>
    %cst_36 = arith.constant 1.000000e+00 : f32
    %162 = vector.broadcast %cst_36 : f32 to vector<8x128xf32>
    %163 = arith.addf %162, %161 : vector<8x128xf32>
    %164 = arith.divf %162, %163 : vector<8x128xf32>
    %cst_37 = arith.constant 2.000000e+00 : f32
    %165 = vector.broadcast %cst_37 : f32 to vector<8x128xf32>
    %166 = arith.mulf %165, %164 : vector<8x128xf32>
    %cst_38 = arith.constant 1.000000e+00 : f32
    %167 = vector.broadcast %cst_38 : f32 to vector<8x128xf32>
    %168 = arith.subf %166, %167 : vector<8x128xf32>
    %169 = arith.select %11, %168, %164 : vector<8x128xi1>, vector<8x128xf32>
    %170 = vector.extract_strided_slice %169 {offsets = [0, 0], sizes = [8, 32], strides = [1, 1]} : vector<8x128xf32> to vector<8x32xf32>
    %171 = vector.extract_strided_slice %169 {offsets = [0, 32], sizes = [8, 32], strides = [1, 1]} : vector<8x128xf32> to vector<8x32xf32>
    %172 = vector.extract_strided_slice %169 {offsets = [0, 64], sizes = [8, 32], strides = [1, 1]} : vector<8x128xf32> to vector<8x32xf32>
    %173 = vector.extract_strided_slice %169 {offsets = [0, 96], sizes = [8, 32], strides = [1, 1]} : vector<8x128xf32> to vector<8x32xf32>
    %174 = arith.mulf %171, %153 : vector<8x32xf32>
    %175 = arith.mulf %170, %172 : vector<8x32xf32>
    %176 = arith.addf %174, %175 : vector<8x32xf32>
    %177 = math.tanh %176 : vector<8x32xf32>
    %178 = arith.mulf %173, %177 : vector<8x32xf32>
    %179 = vector.extract_strided_slice %5 {offsets = [56, 0], sizes = [8, 128], strides = [1, 1]} : vector<64x128xf32> to vector<8x128xf32>
    %cst_39 = arith.constant dense<0.000000e+00> : vector<8x128xf32>
    %180 = tpu.matmul %178, %15, %cst_39 {dimension_numbers = #tpu.dot_dimension_numbers<[1], [0], [0], [1], [0, 0, 1, 1], [], []>} : vector<8x32xf32>, vector<32x128xf32>, vector<8x128xf32> -> vector<8x128xf32>
    %181 = arith.addf %179, %180 : vector<8x128xf32>
    %182 = arith.mulf %181, %14 : vector<8x128xf32>
    %183 = arith.negf %182 : vector<8x128xf32>
    %184 = math.exp %183 : vector<8x128xf32>
    %cst_40 = arith.constant 1.000000e+00 : f32
    %185 = vector.broadcast %cst_40 : f32 to vector<8x128xf32>
    %186 = arith.addf %185, %184 : vector<8x128xf32>
    %187 = arith.divf %185, %186 : vector<8x128xf32>
    %cst_41 = arith.constant 2.000000e+00 : f32
    %188 = vector.broadcast %cst_41 : f32 to vector<8x128xf32>
    %189 = arith.mulf %188, %187 : vector<8x128xf32>
    %cst_42 = arith.constant 1.000000e+00 : f32
    %190 = vector.broadcast %cst_42 : f32 to vector<8x128xf32>
    %191 = arith.subf %189, %190 : vector<8x128xf32>
    %192 = arith.select %11, %191, %187 : vector<8x128xi1>, vector<8x128xf32>
    %193 = vector.extract_strided_slice %192 {offsets = [0, 0], sizes = [8, 32], strides = [1, 1]} : vector<8x128xf32> to vector<8x32xf32>
    %194 = vector.extract_strided_slice %192 {offsets = [0, 32], sizes = [8, 32], strides = [1, 1]} : vector<8x128xf32> to vector<8x32xf32>
    %195 = vector.extract_strided_slice %192 {offsets = [0, 64], sizes = [8, 32], strides = [1, 1]} : vector<8x128xf32> to vector<8x32xf32>
    %196 = vector.extract_strided_slice %192 {offsets = [0, 96], sizes = [8, 32], strides = [1, 1]} : vector<8x128xf32> to vector<8x32xf32>
    %197 = arith.mulf %194, %176 : vector<8x32xf32>
    %198 = arith.mulf %193, %195 : vector<8x32xf32>
    %199 = arith.addf %197, %198 : vector<8x32xf32>
    %200 = math.tanh %199 : vector<8x32xf32>
    %201 = arith.mulf %196, %200 : vector<8x32xf32>
    %202 = tpu.concatenate %40, %63, %86, %109, %132, %155, %178, %201 in 1 : vector<8x32xf32>, vector<8x32xf32>, vector<8x32xf32>, vector<8x32xf32>, vector<8x32xf32>, vector<8x32xf32>, vector<8x32xf32>, vector<8x32xf32> -> vector<8x256xf32>
    %c0_43 = arith.constant 0 : index
    %c0_44 = arith.constant 0 : index
    %203 = vector.load %arg4[%c0_43, %c0_44] : memref<256x512xf32, #tpu.memory_space<vmem>>, vector<256x512xf32>
    %cst_45 = arith.constant dense<0.000000e+00> : vector<8x512xf32>
    %204 = tpu.matmul %202, %203, %cst_45 {dimension_numbers = #tpu.dot_dimension_numbers<[1], [0], [0], [1], [0, 0, 1, 1], [], []>} : vector<8x256xf32>, vector<256x512xf32>, vector<8x512xf32> -> vector<8x512xf32>
    %c0_46 = arith.constant 0 : index
    %c0_47 = arith.constant 0 : index
    %205 = vector.load %arg5[%c0_46, %c0_47] : memref<1x512xf32, #tpu.memory_space<vmem>>, vector<1x512xf32>
    %206 = vector.broadcast %205 : vector<1x512xf32> to vector<8x512xf32>
    %207 = arith.addf %204, %206 : vector<8x512xf32>
    %cst_48 = arith.constant 0.000000e+00 : f32
    %208 = vector.broadcast %cst_48 : f32 to vector<8x512xf32>
    %209 = arith.maximumf %207, %208 : vector<8x512xf32>
    %c0_49 = arith.constant 0 : index
    %c0_50 = arith.constant 0 : index
    %210 = vector.load %arg6[%c0_49, %c0_50] : memref<512x128xf32, #tpu.memory_space<vmem>>, vector<512x128xf32>
    %cst_51 = arith.constant dense<0.000000e+00> : vector<8x128xf32>
    %211 = tpu.matmul %209, %210, %cst_51 {dimension_numbers = #tpu.dot_dimension_numbers<[1], [0], [0], [1], [0, 0, 1, 1], [], []>} : vector<8x512xf32>, vector<512x128xf32>, vector<8x128xf32> -> vector<8x128xf32>
    %c0_52 = arith.constant 0 : index
    %c0_53 = arith.constant 0 : index
    %212 = vector.load %arg7[%c0_52, %c0_53] : memref<1x128xf32, #tpu.memory_space<vmem>>, vector<1x128xf32>
    %213 = vector.broadcast %212 : vector<1x128xf32> to vector<8x128xf32>
    %214 = arith.addf %211, %213 : vector<8x128xf32>
    %c0_54 = arith.constant 0 : index
    %c0_55 = arith.constant 0 : index
    %215 = vector.load %arg8[%c0_54, %c0_55] : memref<8x128xf32, #tpu.memory_space<vmem>>, vector<8x128xf32>
    tpu.vector_store %arg8[%c0_54, %c0_55], %214 {strides = array<i32>} : memref<8x128xf32, #tpu.memory_space<vmem>>, vector<8x128xf32>,
    return
  }
}

</mosaic_0001>

<llo_original>
// kernel: lstm_model.1
$region0: #{lstm_model.1}
  #allocation0 [shape = 'u32[]', space=smem, size = 0x4, offset = 0x4, fixed_abs, tag = 'smem constant byte address 0x4 - core index']
  #allocation1 [shape = 'u32[144,128]{1,0:T(1,128)}', space=vmem, size = 0x12000, scoped, tag = 'internal scratch']
  %s0 = inlined_call_operand.vmem [shape: f32[64,18], index: 0, kind: input, shape index: {}]
  %s1 = inlined_call_operand.vmem [shape: f32[18,128], index: 1, kind: input, shape index: {}]
  %s2 = inlined_call_operand.vmem [shape: f32[32,128], index: 2, kind: input, shape index: {}]
  %s3 = inlined_call_operand.vmem [shape: f32[1,128], index: 3, kind: input, shape index: {}]
  %s4 = inlined_call_operand.vmem [shape: f32[256,512], index: 4, kind: input, shape index: {}]
  %s5 = inlined_call_operand.vmem [shape: f32[1,512], index: 5, kind: input, shape index: {}]
  %s6 = inlined_call_operand.vmem [shape: f32[512,128], index: 6, kind: input, shape index: {}]
  %s7 = inlined_call_operand.vmem [shape: f32[1,128], index: 7, kind: input, shape index: {}]
  %s8 = inlined_call_operand.vmem [shape: f32[8,128], index: 8, kind: output, shape index: {}]
  %s9 = sld [smem:[#allocation0]]
  $region42: #{lstm_model.1} parent=0
    _
  %s11 = ssub.s32 1, %s9
  %s12 = scalar_select 0, %s11, %s9
  // Predicated region
  $region2: #{lstm_model.1} parent=0 // pred_check
    _
  $region3: #{lstm_model.1} parent=0 // pred_check_branch
    %14 = sbr.rel (0) target = $region5
  $region4: #{lstm_model.1} parent=0 // pred_region
    _
  $region5: #{lstm_model.1} parent=0 // pred_fallthru
    _
  // Predicated region
  $region6: #{lstm_model.1} parent=0 // pred_check
    _
  $region7: #{lstm_model.1} parent=0 // pred_check_branch
    %16 = sbr.rel (0) target = $region9
  $region8: #{lstm_model.1} parent=0 // pred_region
    _
  $region9: #{lstm_model.1} parent=0 // pred_fallthru
    _
  // Predicated region
  $region10: #{lstm_model.1} parent=0 // pred_check
    _
  $region11: #{lstm_model.1} parent=0 // pred_check_branch
    %18 = sbr.rel (0) target = $region13
  $region12: #{lstm_model.1} parent=0 // pred_region
    _
  $region13: #{lstm_model.1} parent=0 // pred_fallthru
    _
  // Predicated region
  $region14: #{lstm_model.1} parent=0 // pred_check
    _
  $region15: #{lstm_model.1} parent=0 // pred_check_branch
    %20 = sbr.rel (0) target = $region17
  $region16: #{lstm_model.1} parent=0 // pred_region
    _
  $region17: #{lstm_model.1} parent=0 // pred_fallthru
    _
  // Predicated region
  $region18: #{lstm_model.1} parent=0 // pred_check
    _
  $region19: #{lstm_model.1} parent=0 // pred_check_branch
    %22 = sbr.rel (0) target = $region21
  $region20: #{lstm_model.1} parent=0 // pred_region
    _
  $region21: #{lstm_model.1} parent=0 // pred_fallthru
    _
  // Predicated region
  $region22: #{lstm_model.1} parent=0 // pred_check
    _
  $region23: #{lstm_model.1} parent=0 // pred_check_branch
    %24 = sbr.rel (0) target = $region25
  $region24: #{lstm_model.1} parent=0 // pred_region
    _
  $region25: #{lstm_model.1} parent=0 // pred_fallthru
    _
  // Predicated region
  $region26: #{lstm_model.1} parent=0 // pred_check
    _
  $region27: #{lstm_model.1} parent=0 // pred_check_branch
    %26 = sbr.rel (0) target = $region29
  $region28: #{lstm_model.1} parent=0 // pred_region
    _
  $region29: #{lstm_model.1} parent=0 // pred_fallthru
    _
  // Predicated region
  $region30: #{lstm_model.1} parent=0 // pred_check
    _
  $region31: #{lstm_model.1} parent=0 // pred_check_branch
    %28 = sbr.rel (0) target = $region33
  $region32: #{lstm_model.1} parent=0 // pred_region
    _
  $region33: #{lstm_model.1} parent=0 // pred_fallthru
    _
  %v29 = vld [vmem:[%s0] sm:$0xff]
  %v30 = vld [vmem:[%s0 + $0x8] sm:$0xff]
  %v31 = vld [vmem:[%s0 + $0x10] sm:$0xff]
  %v32 = vld [vmem:[%s0 + $0x18] sm:$0xff]
  %v33 = vld [vmem:[%s0 + $0x20] sm:$0xff]
  %v34 = vld [vmem:[%s0 + $0x28] sm:$0xff]
  %v35 = vld [vmem:[%s0 + $0x30] sm:$0xff]
  %v36 = vld [vmem:[%s0 + $0x38] sm:$0xff]
  %v37 = vld [vmem:[%s1] sm:$0xff]
  %v38 = vld [vmem:[%s1 + $0x8] sm:$0xff]
  %v39 = vld [vmem:[%s1 + $0x10] sm:$0x3]
  %v40 = vld [vmem:[%s3] sm:$0x1]
  %v42 = vlaneseq
  %v43 = vshrl.u32 %v42, 7
  %v44 = vsub.s32 0, %v43
  %v45 = vrot.slane %v40, %v44
  %vm47 = vcmask 146432
  %v49 = vsel %vm47, %v29, 0
  %v52 = vsel %vm47, %v30, 0
  %v55 = vsel %vm47, %v31, 0
  %v58 = vsel %vm47, %v32, 0
  %v61 = vsel %vm47, %v33, 0
  %v64 = vsel %vm47, %v34, 0
  %v67 = vsel %vm47, %v35, 0
  %v70 = vsel %vm47, %v36, 0
  %vm72 = vcmask 1041408
  %v74 = vsel %vm72, %v39, 0
  %76 = vmatprep.subr.mxu0 0.0
  %77 = vmatpush1.msra.mxu0 %v37
  %78 = vmatprep.subr.mxu0 0.0
  %79 = vmatpush1.msra.mxu0 %v38
  %80 = vmatprep.subr.mxu0 0.0
  %81 = vmatpush1.msra.mxu0 %v74
  %82 = vmatprep.subr.mxu0 0.0
  %83 = vmatpush1.msra.mxu0 0.0
  %84 = vmatprep.subr.mxu0 0.0
  %85 = vmatpush1.msra.mxu0 0.0
  %86 = vmatprep.subr.mxu0 0.0
  %87 = vmatpush1.msra.mxu0 0.0
  %88 = vmatprep.subr.mxu0 0.0
  %89 = vmatpush1.msra.mxu0 0.0
  %90 = vmatprep.subr.mxu0 0.0
  %91 = vmatpush1.msra.mxu0 0.0
  %92 = vmatprep.subr.mxu0 0.0
  %93 = vmatpush1.msra.mxu0 0.0
  %94 = vmatprep.subr.mxu0 0.0
  %95 = vmatpush1.msra.mxu0 0.0
  %96 = vmatprep.subr.mxu0 0.0
  %97 = vmatpush1.msra.mxu0 0.0
  %98 = vmatprep.subr.mxu0 0.0
  %99 = vmatpush1.msra.mxu0 0.0
  %100 = vmatprep.subr.mxu0 0.0
  %101 = vmatpush1.msra.mxu0 0.0
  %102 = vmatprep.subr.mxu0 0.0
  %103 = vmatpush1.msra.mxu0 0.0
  %104 = vmatprep.subr.mxu0 0.0
  %105 = vmatpush1.msra.mxu0 0.0
  %106 = vmatprep.subr.mxu0 0.0
  %107 = vmatpush1.msra.mxu0 0.0
  %108 = vmatprep.subr.mxu0 0.0
  %109 = vmatpush1.msra.mxu0 0.0
  %110 = vmatprep.subr.mxu0 0.0
  %111 = vmatpush1.msra.mxu0 0.0
  %112 = vmatprep.subr.mxu0 0.0
  %113 = vmatpush1.msra.mxu0 0.0
  %114 = vmatprep.subr.mxu0 0.0
  %115 = vmatpush1.msra.mxu0 0.0
  %116 = vmatprep.subr.mxu0 0.0
  %117 = vmatpush1.msra.mxu0 0.0
  %118 = vmatprep.subr.mxu0 0.0
  %119 = vmatpush1.msra.mxu0 0.0
  %120 = vmatprep.subr.mxu0 0.0
  %121 = vmatpush1.msra.mxu0 0.0
  %122 = vmatprep.subr.mxu0 0.0
  %123 = vmatpush1.msra.mxu0 0.0
  %124 = vmatprep.subr.mxu0 0.0
  %125 = vmatpush1.msra.mxu0 0.0
  %126 = vmatprep.subr.mxu0 0.0
  %127 = vmatpush1.msra.mxu0 0.0
  %128 = vmatprep.subr.mxu0 0.0
  %129 = vmatpush1.msra.mxu0 0.0
  %130 = vmatprep.subr.mxu0 0.0
  %131 = vmatpush1.msra.mxu0 0.0
  %132 = vmatprep.subr.mxu0 0.0
  %133 = vmatpush1.msra.mxu0 0.0
  %134 = vmatprep.subr.mxu0 0.0
  %135 = vmatpush1.msra.mxu0 0.0
  %136 = vmatprep.subr.mxu0 0.0
  %137 = vmatpush1.msra.mxu0 0.0
  %138 = vmatprep.subr.mxu0 0.0
  %139 = vmatpush1.msra.mxu0 0.0
  %140 = vmatprep.mubr.f32.mxu0 0.0
  %141 = vmatmul.mubr.f32.gmra.mrb[0].mxu0 %v49
  %v142 = vpop.f32.mrb[0].mxu0
  %v143 = vadd.f32 %v45, %v142
  %v144 = vpop.f32.mrb[0].mxu0
  %145 = vmatprep.mubr.f32.mxu0 0.0
  %146 = vmatmul.mubr.f32.gmra.mrb[0].mxu0 %v52
  %v147 = vpop.f32.mrb[0].mxu0
  %v148 = vadd.f32 %v45, %v147
  %v149 = vpop.f32.mrb[0].mxu0
  %150 = vmatprep.mubr.f32.mxu0 0.0
  %151 = vmatmul.mubr.f32.gmra.mrb[0].mxu0 %v55
  %v152 = vpop.f32.mrb[0].mxu0
  %v153 = vadd.f32 %v45, %v152
  %v154 = vpop.f32.mrb[0].mxu0
  %155 = vmatprep.mubr.f32.mxu0 0.0
  %156 = vmatmul.mubr.f32.gmra.mrb[0].mxu0 %v58
  %v157 = vpop.f32.mrb[0].mxu0
  %v158 = vadd.f32 %v45, %v157
  %v159 = vpop.f32.mrb[0].mxu0
  %160 = vmatprep.mubr.f32.mxu0 0.0
  %161 = vmatmul.mubr.f32.gmra.mrb[0].mxu0 %v61
  %v162 = vpop.f32.mrb[0].mxu0
  %v163 = vadd.f32 %v45, %v162
  %v164 = vpop.f32.mrb[0].mxu0
  %165 = vmatprep.mubr.f32.mxu0 0.0
  %166 = vmatmul.mubr.f32.gmra.mrb[0].mxu0 %v64
  %v167 = vpop.f32.mrb[0].mxu0
  %v168 = vadd.f32 %v45, %v167
  %v169 = vpop.f32.mrb[0].mxu0
  %170 = vmatprep.mubr.f32.mxu0 0.0
  %171 = vmatmul.mubr.f32.gmra.mrb[0].mxu0 %v67
  %v172 = vpop.f32.mrb[0].mxu0
  %v173 = vadd.f32 %v45, %v172
  %v174 = vpop.f32.mrb[0].mxu0
  %175 = vmatprep.mubr.f32.mxu0 0.0
  %176 = vmatmul.mubr.f32.gmra.mrb[0].mxu0 %v70
  %v177 = vpop.f32.mrb[0].mxu0
  %v178 = vadd.f32 %v45, %v177
  %v179 = vpop.f32.mrb[0].mxu0
  %180 = vdwg.mxu0
  %v181 = vlaneseq
  %v182 = vand.u32 %v181, 127
  %vm183 = vcmp.ge.s32.totalorder %v182, 64
  %vm184 = vcmp.lt.s32.totalorder %v182, 96
  %vm185 = vmand %vm183, %vm184
  %v186 = vsel %vm185, 2.0, 1.0
  %v187 = vld [vmem:[%s2] sm:$0xff]
  %v188 = vld [vmem:[%s2 + $0x8] sm:$0xff]
  %v189 = vld [vmem:[%s2 + $0x10] sm:$0xff]
  %v190 = vld [vmem:[%s2 + $0x18] sm:$0xff]
  %vm191 = vcmask 261120
  %v193 = vsel %vm191, 0.0, 0
  %195 = vmatprep.subr.mxu0 0.0
  %196 = vmatpush1.msra.mxu0 %v187
  %197 = vmatprep.subr.mxu0 0.0
  %198 = vmatpush1.msra.mxu0 %v188
  %199 = vmatprep.subr.mxu0 0.0
  %200 = vmatpush1.msra.mxu0 %v189
  %201 = vmatprep.subr.mxu0 0.0
  %202 = vmatpush1.msra.mxu0 %v190
  %203 = vmatprep.subr.mxu0 0.0
  %204 = vmatpush1.msra.mxu0 0.0
  %205 = vmatprep.subr.mxu0 0.0
  %206 = vmatpush1.msra.mxu0 0.0
  %207 = vmatprep.subr.mxu0 0.0
  %208 = vmatpush1.msra.mxu0 0.0
  %209 = vmatprep.subr.mxu0 0.0
  %210 = vmatpush1.msra.mxu0 0.0
  %211 = vmatprep.subr.mxu0 0.0
  %212 = vmatpush1.msra.mxu0 0.0
  %213 = vmatprep.subr.mxu0 0.0
  %214 = vmatpush1.msra.mxu0 0.0
  %215 = vmatprep.subr.mxu0 0.0
  %216 = vmatpush1.msra.mxu0 0.0
  %217 = vmatprep.subr.mxu0 0.0
  %218 = vmatpush1.msra.mxu0 0.0
  %219 = vmatprep.subr.mxu0 0.0
  %220 = vmatpush1.msra.mxu0 0.0
  %221 = vmatprep.subr.mxu0 0.0
  %222 = vmatpush1.msra.mxu0 0.0
  %223 = vmatprep.subr.mxu0 0.0
  %224 = vmatpush1.msra.mxu0 0.0
  %225 = vmatprep.subr.mxu0 0.0
  %226 = vmatpush1.msra.mxu0 0.0
  %227 = vmatprep.subr.mxu0 0.0
  %228 = vmatpush1.msra.mxu0 0.0
  %229 = vmatprep.subr.mxu0 0.0
  %230 = vmatpush1.msra.mxu0 0.0
  %231 = vmatprep.subr.mxu0 0.0
  %232 = vmatpush1.msra.mxu0 0.0
  %233 = vmatprep.subr.mxu0 0.0
  %234 = vmatpush1.msra.mxu0 0.0
  %235 = vmatprep.subr.mxu0 0.0
  %236 = vmatpush1.msra.mxu0 0.0
  %237 = vmatprep.subr.mxu0 0.0
  %238 = vmatpush1.msra.mxu0 0.0
  %239 = vmatprep.subr.mxu0 0.0
  %240 = vmatpush1.msra.mxu0 0.0
  %241 = vmatprep.subr.mxu0 0.0
  %242 = vmatpush1.msra.mxu0 0.0
  %243 = vmatprep.subr.mxu0 0.0
  %244 = vmatpush1.msra.mxu0 0.0
  %245 = vmatprep.subr.mxu0 0.0
  %246 = vmatpush1.msra.mxu0 0.0
  %247 = vmatprep.subr.mxu0 0.0
  %248 = vmatpush1.msra.mxu0 0.0
  %249 = vmatprep.subr.mxu0 0.0
  %250 = vmatpush1.msra.mxu0 0.0
  %251 = vmatprep.subr.mxu0 0.0
  %252 = vmatpush1.msra.mxu0 0.0
  %253 = vmatprep.subr.mxu0 0.0
  %254 = vmatpush1.msra.mxu0 0.0
  %255 = vmatprep.subr.mxu0 0.0
  %256 = vmatpush1.msra.mxu0 0.0
  %257 = vmatprep.subr.mxu0 0.0
  %258 = vmatpush1.msra.mxu0 0.0
  %259 = vmatprep.mubr.f32.mxu0 0.0
  %260 = vmatmul.mubr.f32.gmra.mrb[0].mxu0 %v193
  %v261 = vpop.f32.mrb[0].mxu0
  %v262 = vadd.f32 0.0, %v261
  %v263 = vpop.f32.mrb[0].mxu0
  %264 = vdwg.mxu0
  %v265 = vadd.f32 %v143, %v262
  %v266 = vmul.f32 %v265, %v186
  %v267 = vxor.u32 %v266, 2147483648
  %v268 = vmul.f32 %v267, 1.442695
  %v269 = vpow.pop %v268
  %v270 = vadd.f32 %v269, 1.0
  %v271 = vrcp.pop %v270
  %v272 = vmul.f32 1.0, %v271
  %v273 = vmul.f32 %v272, 2.0
  %v274 = vsub.f32 %v273, 1.0
  %v275 = vsel %vm185, %v274, %v272
  %v276 = vmul.f32 %v275, 0.0
  %278 = vrot.lane.b32.xlu0 %v275, 64
  %v279 = vpop.permute.xlu0 %278
  %v281 = vmul.f32 %v275, %v279
  %283 = vrot.lane.b32.xlu0 %v281, 32
  %v284 = vpop.permute.xlu0 %283
  %v286 = vadd.f32 %v276, %v284
  %v287 = vtanh.pop %v286
  %289 = vrot.lane.b32.xlu0 %v287, 64
  %v290 = vpop.permute.xlu0 %289
  %v292 = vmul.f32 %v275, %v290
  %294 = vrot.lane.b32.xlu0 %v292, 32
  %v295 = vpop.permute.xlu0 %294
  %v296 = vsel %vm191, %v295, 0
  %298 = vmatprep.subr.mxu0 0.0
  %299 = vmatpush1.msra.mxu0 %v187
  %300 = vmatprep.subr.mxu0 0.0
  %301 = vmatpush1.msra.mxu0 %v188
  %302 = vmatprep.subr.mxu0 0.0
  %303 = vmatpush1.msra.mxu0 %v189
  %304 = vmatprep.subr.mxu0 0.0
  %305 = vmatpush1.msra.mxu0 %v190
  %306 = vmatprep.subr.mxu0 0.0
  %307 = vmatpush1.msra.mxu0 0.0
  %308 = vmatprep.subr.mxu0 0.0
  %309 = vmatpush1.msra.mxu0 0.0
  %310 = vmatprep.subr.mxu0 0.0
  %311 = vmatpush1.msra.mxu0 0.0
  %312 = vmatprep.subr.mxu0 0.0
  %313 = vmatpush1.msra.mxu0 0.0
  %314 = vmatprep.subr.mxu0 0.0
  %315 = vmatpush1.msra.mxu0 0.0
  %316 = vmatprep.subr.mxu0 0.0
  %317 = vmatpush1.msra.mxu0 0.0
  %318 = vmatprep.subr.mxu0 0.0
  %319 = vmatpush1.msra.mxu0 0.0
  %320 = vmatprep.subr.mxu0 0.0
  %321 = vmatpush1.msra.mxu0 0.0
  %322 = vmatprep.subr.mxu0 0.0
  %323 = vmatpush1.msra.mxu0 0.0
  %324 = vmatprep.subr.mxu0 0.0
  %325 = vmatpush1.msra.mxu0 0.0
  %326 = vmatprep.subr.mxu0 0.0
  %327 = vmatpush1.msra.mxu0 0.0
  %328 = vmatprep.subr.mxu0 0.0
  %329 = vmatpush1.msra.mxu0 0.0
  %330 = vmatprep.subr.mxu0 0.0
  %331 = vmatpush1.msra.mxu0 0.0
  %332 = vmatprep.subr.mxu0 0.0
  %333 = vmatpush1.msra.mxu0 0.0
  %334 = vmatprep.subr.mxu0 0.0
  %335 = vmatpush1.msra.mxu0 0.0
  %336 = vmatprep.subr.mxu0 0.0
  %337 = vmatpush1.msra.mxu0 0.0
  %338 = vmatprep.subr.mxu0 0.0
  %339 = vmatpush1.msra.mxu0 0.0
  %340 = vmatprep.subr.mxu0 0.0
  %341 = vmatpush1.msra.mxu0 0.0
  %342 = vmatprep.subr.mxu0 0.0
  %343 = vmatpush1.msra.mxu0 0.0
  %344 = vmatprep.subr.mxu0 0.0
  %345 = vmatpush1.msra.mxu0 0.0
  %346 = vmatprep.subr.mxu0 0.0
  %347 = vmatpush1.msra.mxu0 0.0
  %348 = vmatprep.subr.mxu0 0.0
  %349 = vmatpush1.msra.mxu0 0.0
  %350 = vmatprep.subr.mxu0 0.0
  %351 = vmatpush1.msra.mxu0 0.0
  %352 = vmatprep.subr.mxu0 0.0
  %353 = vmatpush1.msra.mxu0 0.0
  %354 = vmatprep.subr.mxu0 0.0
  %355 = vmatpush1.msra.mxu0 0.0
  %356 = vmatprep.subr.mxu0 0.0
  %357 = vmatpush1.msra.mxu0 0.0
  %358 = vmatprep.subr.mxu0 0.0
  %359 = vmatpush1.msra.mxu0 0.0
  %360 = vmatprep.subr.mxu0 0.0
  %361 = vmatpush1.msra.mxu0 0.0
  %362 = vmatprep.mubr.f32.mxu0 0.0
  %363 = vmatmul.mubr.f32.gmra.mrb[0].mxu0 %v296
  %v364 = vpop.f32.mrb[0].mxu0
  %v365 = vadd.f32 0.0, %v364
  %v366 = vpop.f32.mrb[0].mxu0
  %367 = vdwg.mxu0
  %v368 = vadd.f32 %v148, %v365
  %v369 = vmul.f32 %v368, %v186
  %v370 = vxor.u32 %v369, 2147483648
  %v371 = vmul.f32 %v370, 1.442695
  %v372 = vpow.pop %v371
  %v373 = vadd.f32 %v372, 1.0
  %v374 = vrcp.pop %v373
  %v375 = vmul.f32 1.0, %v374
  %v376 = vmul.f32 %v375, 2.0
  %v377 = vsub.f32 %v376, 1.0
  %v378 = vsel %vm185, %v377, %v375
  %v379 = vmul.f32 %v378, %v286
  %381 = vrot.lane.b32.xlu0 %v378, 64
  %v382 = vpop.permute.xlu0 %381
  %v384 = vmul.f32 %v378, %v382
  %386 = vrot.lane.b32.xlu0 %v384, 32
  %v387 = vpop.permute.xlu0 %386
  %v389 = vadd.f32 %v379, %v387
  %v390 = vtanh.pop %v389
  %392 = vrot.lane.b32.xlu0 %v390, 64
  %v393 = vpop.permute.xlu0 %392
  %v395 = vmul.f32 %v378, %v393
  %397 = vrot.lane.b32.xlu0 %v395, 32
  %v398 = vpop.permute.xlu0 %397
  %v399 = vsel %vm191, %v398, 0
  %401 = vmatprep.subr.mxu0 0.0
  %402 = vmatpush1.msra.mxu0 %v187
  %403 = vmatprep.subr.mxu0 0.0
  %404 = vmatpush1.msra.mxu0 %v188
  %405 = vmatprep.subr.mxu0 0.0
  %406 = vmatpush1.msra.mxu0 %v189
  %407 = vmatprep.subr.mxu0 0.0
  %408 = vmatpush1.msra.mxu0 %v190
  %409 = vmatprep.subr.mxu0 0.0
  %410 = vmatpush1.msra.mxu0 0.0
  %411 = vmatprep.subr.mxu0 0.0
  %412 = vmatpush1.msra.mxu0 0.0
  %413 = vmatprep.subr.mxu0 0.0
  %414 = vmatpush1.msra.mxu0 0.0
  %415 = vmatprep.subr.mxu0 0.0
  %416 = vmatpush1.msra.mxu0 0.0
  %417 = vmatprep.subr.mxu0 0.0
  %418 = vmatpush1.msra.mxu0 0.0
  %419 = vmatprep.subr.mxu0 0.0
  %420 = vmatpush1.msra.mxu0 0.0
  %421 = vmatprep.subr.mxu0 0.0
  %422 = vmatpush1.msra.mxu0 0.0
  %423 = vmatprep.subr.mxu0 0.0
  %424 = vmatpush1.msra.mxu0 0.0
  %425 = vmatprep.subr.mxu0 0.0
  %426 = vmatpush1.msra.mxu0 0.0
  %427 = vmatprep.subr.mxu0 0.0
  %428 = vmatpush1.msra.mxu0 0.0
  %429 = vmatprep.subr.mxu0 0.0
  %430 = vmatpush1.msra.mxu0 0.0
  %431 = vmatprep.subr.mxu0 0.0
  %432 = vmatpush1.msra.mxu0 0.0
  %433 = vmatprep.subr.mxu0 0.0
  %434 = vmatpush1.msra.mxu0 0.0
  %435 = vmatprep.subr.mxu0 0.0
  %436 = vmatpush1.msra.mxu0 0.0
  %437 = vmatprep.subr.mxu0 0.0
  %438 = vmatpush1.msra.mxu0 0.0
  %439 = vmatprep.subr.mxu0 0.0
  %440 = vmatpush1.msra.mxu0 0.0
  %441 = vmatprep.subr.mxu0 0.0
  %442 = vmatpush1.msra.mxu0 0.0
  %443 = vmatprep.subr.mxu0 0.0
  %444 = vmatpush1.msra.mxu0 0.0
  %445 = vmatprep.subr.mxu0 0.0
  %446 = vmatpush1.msra.mxu0 0.0
  %447 = vmatprep.subr.mxu0 0.0
  %448 = vmatpush1.msra.mxu0 0.0
  %449 = vmatprep.subr.mxu0 0.0
  %450 = vmatpush1.msra.mxu0 0.0
  %451 = vmatprep.subr.mxu0 0.0
  %452 = vmatpush1.msra.mxu0 0.0
  %453 = vmatprep.subr.mxu0 0.0
  %454 = vmatpush1.msra.mxu0 0.0
  %455 = vmatprep.subr.mxu0 0.0
  %456 = vmatpush1.msra.mxu0 0.0
  %457 = vmatprep.subr.mxu0 0.0
  %458 = vmatpush1.msra.mxu0 0.0
  %459 = vmatprep.subr.mxu0 0.0
  %460 = vmatpush1.msra.mxu0 0.0
  %461 = vmatprep.subr.mxu0 0.0
  %462 = vmatpush1.msra.mxu0 0.0
  %463 = vmatprep.subr.mxu0 0.0
  %464 = vmatpush1.msra.mxu0 0.0
  %465 = vmatprep.mubr.f32.mxu0 0.0
  %466 = vmatmul.mubr.f32.gmra.mrb[0].mxu0 %v399
  %v467 = vpop.f32.mrb[0].mxu0
  %v468 = vadd.f32 0.0, %v467
  %v469 = vpop.f32.mrb[0].mxu0
  %470 = vdwg.mxu0
  %v471 = vadd.f32 %v153, %v468
  %v472 = vmul.f32 %v471, %v186
  %v473 = vxor.u32 %v472, 2147483648
  %v474 = vmul.f32 %v473, 1.442695
  %v475 = vpow.pop %v474
  %v476 = vadd.f32 %v475, 1.0
  %v477 = vrcp.pop %v476
  %v478 = vmul.f32 1.0, %v477
  %v479 = vmul.f32 %v478, 2.0
  %v480 = vsub.f32 %v479, 1.0
  %v481 = vsel %vm185, %v480, %v478
  %v482 = vmul.f32 %v481, %v389
  %484 = vrot.lane.b32.xlu0 %v481, 64
  %v485 = vpop.permute.xlu0 %484
  %v487 = vmul.f32 %v481, %v485
  %489 = vrot.lane.b32.xlu0 %v487, 32
  %v490 = vpop.permute.xlu0 %489
  %v492 = vadd.f32 %v482, %v490
  %v493 = vtanh.pop %v492
  %495 = vrot.lane.b32.xlu0 %v493, 64
  %v496 = vpop.permute.xlu0 %495
  %v498 = vmul.f32 %v481, %v496
  %500 = vrot.lane.b32.xlu0 %v498, 32
  %v501 = vpop.permute.xlu0 %500
  %v502 = vsel %vm191, %v501, 0
  %504 = vmatprep.subr.mxu0 0.0
  %505 = vmatpush1.msra.mxu0 %v187
  %506 = vmatprep.subr.mxu0 0.0
  %507 = vmatpush1.msra.mxu0 %v188
  %508 = vmatprep.subr.mxu0 0.0
  %509 = vmatpush1.msra.mxu0 %v189
  %510 = vmatprep.subr.mxu0 0.0
  %511 = vmatpush1.msra.mxu0 %v190
  %512 = vmatprep.subr.mxu0 0.0
  %513 = vmatpush1.msra.mxu0 0.0
  %514 = vmatprep.subr.mxu0 0.0
  %515 = vmatpush1.msra.mxu0 0.0
  %516 = vmatprep.subr.mxu0 0.0
  %517 = vmatpush1.msra.mxu0 0.0
  %518 = vmatprep.subr.mxu0 0.0
  %519 = vmatpush1.msra.mxu0 0.0
  %520 = vmatprep.subr.mxu0 0.0
  %521 = vmatpush1.msra.mxu0 0.0
  %522 = vmatprep.subr.mxu0 0.0
  %523 = vmatpush1.msra.mxu0 0.0
  %524 = vmatprep.subr.mxu0 0.0
  %525 = vmatpush1.msra.mxu0 0.0
  %526 = vmatprep.subr.mxu0 0.0
  %527 = vmatpush1.msra.mxu0 0.0
  %528 = vmatprep.subr.mxu0 0.0
  %529 = vmatpush1.msra.mxu0 0.0
  %530 = vmatprep.subr.mxu0 0.0
  %531 = vmatpush1.msra.mxu0 0.0
  %532 = vmatprep.subr.mxu0 0.0
  %533 = vmatpush1.msra.mxu0 0.0
  %534 = vmatprep.subr.mxu0 0.0
  %535 = vmatpush1.msra.mxu0 0.0
  %536 = vmatprep.subr.mxu0 0.0
  %537 = vmatpush1.msra.mxu0 0.0
  %538 = vmatprep.subr.mxu0 0.0
  %539 = vmatpush1.msra.mxu0 0.0
  %540 = vmatprep.subr.mxu0 0.0
  %541 = vmatpush1.msra.mxu0 0.0
  %542 = vmatprep.subr.mxu0 0.0
  %543 = vmatpush1.msra.mxu0 0.0
  %544 = vmatprep.subr.mxu0 0.0
  %545 = vmatpush1.msra.mxu0 0.0
  %546 = vmatprep.subr.mxu0 0.0
  %547 = vmatpush1.msra.mxu0 0.0
  %548 = vmatprep.subr.mxu0 0.0
  %549 = vmatpush1.msra.mxu0 0.0
  %550 = vmatprep.subr.mxu0 0.0
  %551 = vmatpush1.msra.mxu0 0.0
  %552 = vmatprep.subr.mxu0 0.0
  %553 = vmatpush1.msra.mxu0 0.0
  %554 = vmatprep.subr.mxu0 0.0
  %555 = vmatpush1.msra.mxu0 0.0
  %556 = vmatprep.subr.mxu0 0.0
  %557 = vmatpush1.msra.mxu0 0.0
  %558 = vmatprep.subr.mxu0 0.0
  %559 = vmatpush1.msra.mxu0 0.0
  %560 = vmatprep.subr.mxu0 0.0
  %561 = vmatpush1.msra.mxu0 0.0
  %562 = vmatprep.subr.mxu0 0.0
  %563 = vmatpush1.msra.mxu0 0.0
  %564 = vmatprep.subr.mxu0 0.0
  %565 = vmatpush1.msra.mxu0 0.0
  %566 = vmatprep.subr.mxu0 0.0
  %567 = vmatpush1.msra.mxu0 0.0
  %568 = vmatprep.mubr.f32.mxu0 0.0
  %569 = vmatmul.mubr.f32.gmra.mrb[0].mxu0 %v502
  %v570 = vpop.f32.mrb[0].mxu0
  %v571 = vadd.f32 0.0, %v570
  %v572 = vpop.f32.mrb[0].mxu0
  %573 = vdwg.mxu0
  %v574 = vadd.f32 %v158, %v571
  %v575 = vmul.f32 %v574, %v186
  %v576 = vxor.u32 %v575, 2147483648
  %v577 = vmul.f32 %v576, 1.442695
  %v578 = vpow.pop %v577
  %v579 = vadd.f32 %v578, 1.0
  %v580 = vrcp.pop %v579
  %v581 = vmul.f32 1.0, %v580
  %v582 = vmul.f32 %v581, 2.0
  %v583 = vsub.f32 %v582, 1.0
  %v584 = vsel %vm185, %v583, %v581
  %v585 = vmul.f32 %v584, %v492
  %587 = vrot.lane.b32.xlu0 %v584, 64
  %v588 = vpop.permute.xlu0 %587
  %v590 = vmul.f32 %v584, %v588
  %592 = vrot.lane.b32.xlu0 %v590, 32
  %v593 = vpop.permute.xlu0 %592
  %v595 = vadd.f32 %v585, %v593
  %v596 = vtanh.pop %v595
  %598 = vrot.lane.b32.xlu0 %v596, 64
  %v599 = vpop.permute.xlu0 %598
  %v601 = vmul.f32 %v584, %v599
  %603 = vrot.lane.b32.xlu0 %v601, 32
  %v604 = vpop.permute.xlu0 %603
  %v605 = vsel %vm191, %v604, 0
  %607 = vmatprep.subr.mxu0 0.0
  %608 = vmatpush1.msra.mxu0 %v187
  %609 = vmatprep.subr.mxu0 0.0
  %610 = vmatpush1.msra.mxu0 %v188
  %611 = vmatprep.subr.mxu0 0.0
  %612 = vmatpush1.msra.mxu0 %v189
  %613 = vmatprep.subr.mxu0 0.0
  %614 = vmatpush1.msra.mxu0 %v190
  %615 = vmatprep.subr.mxu0 0.0
  %616 = vmatpush1.msra.mxu0 0.0
  %617 = vmatprep.subr.mxu0 0.0
  %618 = vmatpush1.msra.mxu0 0.0
  %619 = vmatprep.subr.mxu0 0.0
  %620 = vmatpush1.msra.mxu0 0.0
  %621 = vmatprep.subr.mxu0 0.0
  %622 = vmatpush1.msra.mxu0 0.0
  %623 = vmatprep.subr.mxu0 0.0
  %624 = vmatpush1.msra.mxu0 0.0
  %625 = vmatprep.subr.mxu0 0.0
  %626 = vmatpush1.msra.mxu0 0.0
  %627 = vmatprep.subr.mxu0 0.0
  %628 = vmatpush1.msra.mxu0 0.0
  %629 = vmatprep.subr.mxu0 0.0
  %630 = vmatpush1.msra.mxu0 0.0
  %631 = vmatprep.subr.mxu0 0.0
  %632 = vmatpush1.msra.mxu0 0.0
  %633 = vmatprep.subr.mxu0 0.0
  %634 = vmatpush1.msra.mxu0 0.0
  %635 = vmatprep.subr.mxu0 0.0
  %636 = vmatpush1.msra.mxu0 0.0
  %637 = vmatprep.subr.mxu0 0.0
  %638 = vmatpush1.msra.mxu0 0.0
  %639 = vmatprep.subr.mxu0 0.0
  %640 = vmatpush1.msra.mxu0 0.0
  %641 = vmatprep.subr.mxu0 0.0
  %642 = vmatpush1.msra.mxu0 0.0
  %643 = vmatprep.subr.mxu0 0.0
  %644 = vmatpush1.msra.mxu0 0.0
  %645 = vmatprep.subr.mxu0 0.0
  %646 = vmatpush1.msra.mxu0 0.0
  %647 = vmatprep.subr.mxu0 0.0
  %648 = vmatpush1.msra.mxu0 0.0
  %649 = vmatprep.subr.mxu0 0.0
  %650 = vmatpush1.msra.mxu0 0.0
  %651 = vmatprep.subr.mxu0 0.0
  %652 = vmatpush1.msra.mxu0 0.0
  %653 = vmatprep.subr.mxu0 0.0
  %654 = vmatpush1.msra.mxu0 0.0
  %655 = vmatprep.subr.mxu0 0.0
  %656 = vmatpush1.msra.mxu0 0.0
  %657 = vmatprep.subr.mxu0 0.0
  %658 = vmatpush1.msra.mxu0 0.0
  %659 = vmatprep.subr.mxu0 0.0
  %660 = vmatpush1.msra.mxu0 0.0
  %661 = vmatprep.subr.mxu0 0.0
  %662 = vmatpush1.msra.mxu0 0.0
  %663 = vmatprep.subr.mxu0 0.0
  %664 = vmatpush1.msra.mxu0 0.0
  %665 = vmatprep.subr.mxu0 0.0
  %666 = vmatpush1.msra.mxu0 0.0
  %667 = vmatprep.subr.mxu0 0.0
  %668 = vmatpush1.msra.mxu0 0.0
  %669 = vmatprep.subr.mxu0 0.0
  %670 = vmatpush1.msra.mxu0 0.0
  %671 = vmatprep.mubr.f32.mxu0 0.0
  %672 = vmatmul.mubr.f32.gmra.mrb[0].mxu0 %v605
  %v673 = vpop.f32.mrb[0].mxu0
  %v674 = vadd.f32 0.0, %v673
  %v675 = vpop.f32.mrb[0].mxu0
  %676 = vdwg.mxu0
  %v677 = vadd.f32 %v163, %v674
  %v678 = vmul.f32 %v677, %v186
  %v679 = vxor.u32 %v678, 2147483648
  %v680 = vmul.f32 %v679, 1.442695
  %v681 = vpow.pop %v680
  %v682 = vadd.f32 %v681, 1.0
  %v683 = vrcp.pop %v682
  %v684 = vmul.f32 1.0, %v683
  %v685 = vmul.f32 %v684, 2.0
  %v686 = vsub.f32 %v685, 1.0
  %v687 = vsel %vm185, %v686, %v684
  %v688 = vmul.f32 %v687, %v595
  %690 = vrot.lane.b32.xlu0 %v687, 64
  %v691 = vpop.permute.xlu0 %690
  %v693 = vmul.f32 %v687, %v691
  %695 = vrot.lane.b32.xlu0 %v693, 32
  %v696 = vpop.permute.xlu0 %695
  %v698 = vadd.f32 %v688, %v696
  %v699 = vtanh.pop %v698
  %701 = vrot.lane.b32.xlu0 %v699, 64
  %v702 = vpop.permute.xlu0 %701
  %v704 = vmul.f32 %v687, %v702
  %706 = vrot.lane.b32.xlu0 %v704, 32
  %v707 = vpop.permute.xlu0 %706
  %v708 = vsel %vm191, %v707, 0
  %710 = vmatprep.subr.mxu0 0.0
  %711 = vmatpush1.msra.mxu0 %v187
  %712 = vmatprep.subr.mxu0 0.0
  %713 = vmatpush1.msra.mxu0 %v188
  %714 = vmatprep.subr.mxu0 0.0
  %715 = vmatpush1.msra.mxu0 %v189
  %716 = vmatprep.subr.mxu0 0.0
  %717 = vmatpush1.msra.mxu0 %v190
  %718 = vmatprep.subr.mxu0 0.0
  %719 = vmatpush1.msra.mxu0 0.0
  %720 = vmatprep.subr.mxu0 0.0
  %721 = vmatpush1.msra.mxu0 0.0
  %722 = vmatprep.subr.mxu0 0.0
  %723 = vmatpush1.msra.mxu0 0.0
  %724 = vmatprep.subr.mxu0 0.0
  %725 = vmatpush1.msra.mxu0 0.0
  %726 = vmatprep.subr.mxu0 0.0
  %727 = vmatpush1.msra.mxu0 0.0
  %728 = vmatprep.subr.mxu0 0.0
  %729 = vmatpush1.msra.mxu0 0.0
  %730 = vmatprep.subr.mxu0 0.0
  %731 = vmatpush1.msra.mxu0 0.0
  %732 = vmatprep.subr.mxu0 0.0
  %733 = vmatpush1.msra.mxu0 0.0
  %734 = vmatprep.subr.mxu0 0.0
  %735 = vmatpush1.msra.mxu0 0.0
  %736 = vmatprep.subr.mxu0 0.0
  %737 = vmatpush1.msra.mxu0 0.0
  %738 = vmatprep.subr.mxu0 0.0
  %739 = vmatpush1.msra.mxu0 0.0
  %740 = vmatprep.subr.mxu0 0.0
  %741 = vmatpush1.msra.mxu0 0.0
  %742 = vmatprep.subr.mxu0 0.0
  %743 = vmatpush1.msra.mxu0 0.0
  %744 = vmatprep.subr.mxu0 0.0
  %745 = vmatpush1.msra.mxu0 0.0
  %746 = vmatprep.subr.mxu0 0.0
  %747 = vmatpush1.msra.mxu0 0.0
  %748 = vmatprep.subr.mxu0 0.0
  %749 = vmatpush1.msra.mxu0 0.0
  %750 = vmatprep.subr.mxu0 0.0
  %751 = vmatpush1.msra.mxu0 0.0
  %752 = vmatprep.subr.mxu0 0.0
  %753 = vmatpush1.msra.mxu0 0.0
  %754 = vmatprep.subr.mxu0 0.0
  %755 = vmatpush1.msra.mxu0 0.0
  %756 = vmatprep.subr.mxu0 0.0
  %757 = vmatpush1.msra.mxu0 0.0
  %758 = vmatprep.subr.mxu0 0.0
  %759 = vmatpush1.msra.mxu0 0.0
  %760 = vmatprep.subr.mxu0 0.0
  %761 = vmatpush1.msra.mxu0 0.0
  %762 = vmatprep.subr.mxu0 0.0
  %763 = vmatpush1.msra.mxu0 0.0
  %764 = vmatprep.subr.mxu0 0.0
  %765 = vmatpush1.msra.mxu0 0.0
  %766 = vmatprep.subr.mxu0 0.0
  %767 = vmatpush1.msra.mxu0 0.0
  %768 = vmatprep.subr.mxu0 0.0
  %769 = vmatpush1.msra.mxu0 0.0
  %770 = vmatprep.subr.mxu0 0.0
  %771 = vmatpush1.msra.mxu0 0.0
  %772 = vmatprep.subr.mxu0 0.0
  %773 = vmatpush1.msra.mxu0 0.0
  %774 = vmatprep.mubr.f32.mxu0 0.0
  %775 = vmatmul.mubr.f32.gmra.mrb[0].mxu0 %v708
  %v776 = vpop.f32.mrb[0].mxu0
  %v777 = vadd.f32 0.0, %v776
  %v778 = vpop.f32.mrb[0].mxu0
  %779 = vdwg.mxu0
  %v780 = vadd.f32 %v168, %v777
  %v781 = vmul.f32 %v780, %v186
  %v782 = vxor.u32 %v781, 2147483648
  %v783 = vmul.f32 %v782, 1.442695
  %v784 = vpow.pop %v783
  %v785 = vadd.f32 %v784, 1.0
  %v786 = vrcp.pop %v785
  %v787 = vmul.f32 1.0, %v786
  %v788 = vmul.f32 %v787, 2.0
  %v789 = vsub.f32 %v788, 1.0
  %v790 = vsel %vm185, %v789, %v787
  %v791 = vmul.f32 %v790, %v698
  %793 = vrot.lane.b32.xlu0 %v790, 64
  %v794 = vpop.permute.xlu0 %793
  %v796 = vmul.f32 %v790, %v794
  %798 = vrot.lane.b32.xlu0 %v796, 32
  %v799 = vpop.permute.xlu0 %798
  %v801 = vadd.f32 %v791, %v799
  %v802 = vtanh.pop %v801
  %804 = vrot.lane.b32.xlu0 %v802, 64
  %v805 = vpop.permute.xlu0 %804
  %v807 = vmul.f32 %v790, %v805
  %809 = vrot.lane.b32.xlu0 %v807, 32
  %v810 = vpop.permute.xlu0 %809
  %v811 = vsel %vm191, %v810, 0
  %813 = vmatprep.subr.mxu0 0.0
  %814 = vmatpush1.msra.mxu0 %v187
  %815 = vmatprep.subr.mxu0 0.0
  %816 = vmatpush1.msra.mxu0 %v188
  %817 = vmatprep.subr.mxu0 0.0
  %818 = vmatpush1.msra.mxu0 %v189
  %819 = vmatprep.subr.mxu0 0.0
  %820 = vmatpush1.msra.mxu0 %v190
  %821 = vmatprep.subr.mxu0 0.0
  %822 = vmatpush1.msra.mxu0 0.0
  %823 = vmatprep.subr.mxu0 0.0
  %824 = vmatpush1.msra.mxu0 0.0
  %825 = vmatprep.subr.mxu0 0.0
  %826 = vmatpush1.msra.mxu0 0.0
  %827 = vmatprep.subr.mxu0 0.0
  %828 = vmatpush1.msra.mxu0 0.0
  %829 = vmatprep.subr.mxu0 0.0
  %830 = vmatpush1.msra.mxu0 0.0
  %831 = vmatprep.subr.mxu0 0.0
  %832 = vmatpush1.msra.mxu0 0.0
  %833 = vmatprep.subr.mxu0 0.0
  %834 = vmatpush1.msra.mxu0 0.0
  %835 = vmatprep.subr.mxu0 0.0
  %836 = vmatpush1.msra.mxu0 0.0
  %837 = vmatprep.subr.mxu0 0.0
  %838 = vmatpush1.msra.mxu0 0.0
  %839 = vmatprep.subr.mxu0 0.0
  %840 = vmatpush1.msra.mxu0 0.0
  %841 = vmatprep.subr.mxu0 0.0
  %842 = vmatpush1.msra.mxu0 0.0
  %843 = vmatprep.subr.mxu0 0.0
  %844 = vmatpush1.msra.mxu0 0.0
  %845 = vmatprep.subr.mxu0 0.0
  %846 = vmatpush1.msra.mxu0 0.0
  %847 = vmatprep.subr.mxu0 0.0
  %848 = vmatpush1.msra.mxu0 0.0
  %849 = vmatprep.subr.mxu0 0.0
  %850 = vmatpush1.msra.mxu0 0.0
  %851 = vmatprep.subr.mxu0 0.0
  %852 = vmatpush1.msra.mxu0 0.0
  %853 = vmatprep.subr.mxu0 0.0
  %854 = vmatpush1.msra.mxu0 0.0
  %855 = vmatprep.subr.mxu0 0.0
  %856 = vmatpush1.msra.mxu0 0.0
  %857 = vmatprep.subr.mxu0 0.0
  %858 = vmatpush1.msra.mxu0 0.0
  %859 = vmatprep.subr.mxu0 0.0
  %860 = vmatpush1.msra.mxu0 0.0
  %861 = vmatprep.subr.mxu0 0.0
  %862 = vmatpush1.msra.mxu0 0.0
  %863 = vmatprep.subr.mxu0 0.0
  %864 = vmatpush1.msra.mxu0 0.0
  %865 = vmatprep.subr.mxu0 0.0
  %866 = vmatpush1.msra.mxu0 0.0
  %867 = vmatprep.subr.mxu0 0.0
  %868 = vmatpush1.msra.mxu0 0.0
  %869 = vmatprep.subr.mxu0 0.0
  %870 = vmatpush1.msra.mxu0 0.0
  %871 = vmatprep.subr.mxu0 0.0
  %872 = vmatpush1.msra.mxu0 0.0
  %873 = vmatprep.subr.mxu0 0.0
  %874 = vmatpush1.msra.mxu0 0.0
  %875 = vmatprep.subr.mxu0 0.0
  %876 = vmatpush1.msra.mxu0 0.0
  %877 = vmatprep.mubr.f32.mxu0 0.0
  %878 = vmatmul.mubr.f32.gmra.mrb[0].mxu0 %v811
  %v879 = vpop.f32.mrb[0].mxu0
  %v880 = vadd.f32 0.0, %v879
  %v881 = vpop.f32.mrb[0].mxu0
  %882 = vdwg.mxu0
  %v883 = vadd.f32 %v173, %v880
  %v884 = vmul.f32 %v883, %v186
  %v885 = vxor.u32 %v884, 2147483648
  %v886 = vmul.f32 %v885, 1.442695
  %v887 = vpow.pop %v886
  %v888 = vadd.f32 %v887, 1.0
  %v889 = vrcp.pop %v888
  %v890 = vmul.f32 1.0, %v889
  %v891 = vmul.f32 %v890, 2.0
  %v892 = vsub.f32 %v891, 1.0
  %v893 = vsel %vm185, %v892, %v890
  %v894 = vmul.f32 %v893, %v801
  %896 = vrot.lane.b32.xlu0 %v893, 64
  %v897 = vpop.permute.xlu0 %896
  %v899 = vmul.f32 %v893, %v897
  %901 = vrot.lane.b32.xlu0 %v899, 32
  %v902 = vpop.permute.xlu0 %901
  %v904 = vadd.f32 %v894, %v902
  %v905 = vtanh.pop %v904
  %907 = vrot.lane.b32.xlu0 %v905, 64
  %v908 = vpop.permute.xlu0 %907
  %v910 = vmul.f32 %v893, %v908
  %912 = vrot.lane.b32.xlu0 %v910, 32
  %v913 = vpop.permute.xlu0 %912
  %v914 = vsel %vm191, %v913, 0
  %916 = vmatprep.subr.mxu0 0.0
  %917 = vmatpush1.msra.mxu0 %v187
  %918 = vmatprep.subr.mxu0 0.0
  %919 = vmatpush1.msra.mxu0 %v188
  %920 = vmatprep.subr.mxu0 0.0
  %921 = vmatpush1.msra.mxu0 %v189
  %922 = vmatprep.subr.mxu0 0.0
  %923 = vmatpush1.msra.mxu0 %v190
  %924 = vmatprep.subr.mxu0 0.0
  %925 = vmatpush1.msra.mxu0 0.0
  %926 = vmatprep.subr.mxu0 0.0
  %927 = vmatpush1.msra.mxu0 0.0
  %928 = vmatprep.subr.mxu0 0.0
  %929 = vmatpush1.msra.mxu0 0.0
  %930 = vmatprep.subr.mxu0 0.0
  %931 = vmatpush1.msra.mxu0 0.0
  %932 = vmatprep.subr.mxu0 0.0
  %933 = vmatpush1.msra.mxu0 0.0
  %934 = vmatprep.subr.mxu0 0.0
  %935 = vmatpush1.msra.mxu0 0.0
  %936 = vmatprep.subr.mxu0 0.0
  %937 = vmatpush1.msra.mxu0 0.0
  %938 = vmatprep.subr.mxu0 0.0
  %939 = vmatpush1.msra.mxu0 0.0
  %940 = vmatprep.subr.mxu0 0.0
  %941 = vmatpush1.msra.mxu0 0.0
  %942 = vmatprep.subr.mxu0 0.0
  %943 = vmatpush1.msra.mxu0 0.0
  %944 = vmatprep.subr.mxu0 0.0
  %945 = vmatpush1.msra.mxu0 0.0
  %946 = vmatprep.subr.mxu0 0.0
  %947 = vmatpush1.msra.mxu0 0.0
  %948 = vmatprep.subr.mxu0 0.0
  %949 = vmatpush1.msra.mxu0 0.0
  %950 = vmatprep.subr.mxu0 0.0
  %951 = vmatpush1.msra.mxu0 0.0
  %952 = vmatprep.subr.mxu0 0.0
  %953 = vmatpush1.msra.mxu0 0.0
  %954 = vmatprep.subr.mxu0 0.0
  %955 = vmatpush1.msra.mxu0 0.0
  %956 = vmatprep.subr.mxu0 0.0
  %957 = vmatpush1.msra.mxu0 0.0
  %958 = vmatprep.subr.mxu0 0.0
  %959 = vmatpush1.msra.mxu0 0.0
  %960 = vmatprep.subr.mxu0 0.0
  %961 = vmatpush1.msra.mxu0 0.0
  %962 = vmatprep.subr.mxu0 0.0
  %963 = vmatpush1.msra.mxu0 0.0
  %964 = vmatprep.subr.mxu0 0.0
  %965 = vmatpush1.msra.mxu0 0.0
  %966 = vmatprep.subr.mxu0 0.0
  %967 = vmatpush1.msra.mxu0 0.0
  %968 = vmatprep.subr.mxu0 0.0
  %969 = vmatpush1.msra.mxu0 0.0
  %970 = vmatprep.subr.mxu0 0.0
  %971 = vmatpush1.msra.mxu0 0.0
  %972 = vmatprep.subr.mxu0 0.0
  %973 = vmatpush1.msra.mxu0 0.0
  %974 = vmatprep.subr.mxu0 0.0
  %975 = vmatpush1.msra.mxu0 0.0
  %976 = vmatprep.subr.mxu0 0.0
  %977 = vmatpush1.msra.mxu0 0.0
  %978 = vmatprep.subr.mxu0 0.0
  %979 = vmatpush1.msra.mxu0 0.0
  %980 = vmatprep.mubr.f32.mxu0 0.0
  %981 = vmatmul.mubr.f32.gmra.mrb[0].mxu0 %v914
  %v982 = vpop.f32.mrb[0].mxu0
  %v983 = vadd.f32 0.0, %v982
  %v984 = vpop.f32.mrb[0].mxu0
  %985 = vdwg.mxu0
  %v986 = vadd.f32 %v178, %v983
  %v987 = vmul.f32 %v986, %v186
  %v988 = vxor.u32 %v987, 2147483648
  %v989 = vmul.f32 %v988, 1.442695
  %v990 = vpow.pop %v989
  %v991 = vadd.f32 %v990, 1.0
  %v992 = vrcp.pop %v991
  %v993 = vmul.f32 1.0, %v992
  %v994 = vmul.f32 %v993, 2.0
  %v995 = vsub.f32 %v994, 1.0
  %v996 = vsel %vm185, %v995, %v993
  %v997 = vmul.f32 %v996, %v904
  %999 = vrot.lane.b32.xlu0 %v996, 64
  %v1000 = vpop.permute.xlu0 %999
  %v1002 = vmul.f32 %v996, %v1000
  %1004 = vrot.lane.b32.xlu0 %v1002, 32
  %v1005 = vpop.permute.xlu0 %1004
  %v1007 = vadd.f32 %v997, %v1005
  %v1008 = vtanh.pop %v1007
  %1010 = vrot.lane.b32.xlu0 %v1008, 64
  %v1011 = vpop.permute.xlu0 %1010
  %v1013 = vmul.f32 %v996, %v1011
  %1015 = vrot.lane.b32.xlu0 %v395, 64
  %v1016 = vpop.permute.xlu0 %1015
  %1018 = vrot.lane.b32.xlu0 %v498, 96
  %v1019 = vpop.permute.xlu0 %1018
  %1022 = vrot.lane.b32.xlu0 %v807, 64
  %v1023 = vpop.permute.xlu0 %1022
  %1025 = vrot.lane.b32.xlu0 %v910, 96
  %v1026 = vpop.permute.xlu0 %1025
  %v1028 = vsel %vm191, %v295, %v1016
  %vm1029 = vcmask 523264
  %v1030 = vsel %vm1029, %v1028, %v1019
  %vm1031 = vcmask 785408
  %v1032 = vsel %vm1031, %v1030, %v601
  %v1033 = vsel %vm191, %v707, %v1023
  %v1034 = vsel %vm1029, %v1033, %v1026
  %v1035 = vsel %vm1031, %v1034, %v1013
  %v1036 = vld [vmem:[%s4] sm:$0xff]
  %v1037 = vld [vmem:[%s4 + $0x8] sm:$0xff]
  %v1038 = vld [vmem:[%s4 + $0x10] sm:$0xff]
  %v1039 = vld [vmem:[%s4 + $0x18] sm:$0xff]
  %v1040 = vld [vmem:[%s4 + $0x20] sm:$0xff]
  %v1041 = vld [vmem:[%s4 + $0x28] sm:$0xff]
  %v1042 = vld [vmem:[%s4 + $0x30] sm:$0xff]
  %v1043 = vld [vmem:[%s4 + $0x38] sm:$0xff]
  %v1044 = vld [vmem:[%s4 + $0x40] sm:$0xff]
  %v1045 = vld [vmem:[%s4 + $0x48] sm:$0xff]
  %v1046 = vld [vmem:[%s4 + $0x50] sm:$0xff]
  %v1047 = vld [vmem:[%s4 + $0x58] sm:$0xff]
  %v1048 = vld [vmem:[%s4 + $0x60] sm:$0xff]
  %v1049 = vld [vmem:[%s4 + $0x68] sm:$0xff]
  %v1050 = vld [vmem:[%s4 + $0x70] sm:$0xff]
  %v1051 = vld [vmem:[%s4 + $0x78] sm:$0xff]
  %v1052 = vld [vmem:[%s4 + $0x80] sm:$0xff]
  %v1053 = vld [vmem:[%s4 + $0x88] sm:$0xff]
  %v1054 = vld [vmem:[%s4 + $0x90] sm:$0xff]
  %v1055 = vld [vmem:[%s4 + $0x98] sm:$0xff]
  %v1056 = vld [vmem:[%s4 + $0xa0] sm:$0xff]
  %v1057 = vld [vmem:[%s4 + $0xa8] sm:$0xff]
  %v1058 = vld [vmem:[%s4 + $0xb0] sm:$0xff]
  %v1059 = vld [vmem:[%s4 + $0xb8] sm:$0xff]
  %v1060 = vld [vmem:[%s4 + $0xc0] sm:$0xff]
  %v1061 = vld [vmem:[%s4 + $0xc8] sm:$0xff]
  %v1062 = vld [vmem:[%s4 + $0xd0] sm:$0xff]
  %v1063 = vld [vmem:[%s4 + $0xd8] sm:$0xff]
  %v1064 = vld [vmem:[%s4 + $0xe0] sm:$0xff]
  %v1065 = vld [vmem:[%s4 + $0xe8] sm:$0xff]
  %v1066 = vld [vmem:[%s4 + $0xf0] sm:$0xff]
  %v1067 = vld [vmem:[%s4 + $0xf8] sm:$0xff]
  %v1068 = vld [vmem:[%s4 + $0x100] sm:$0xff]
  %v1069 = vld [vmem:[%s4 + $0x108] sm:$0xff]
  %v1070 = vld [vmem:[%s4 + $0x110] sm:$0xff]
  %v1071 = vld [vmem:[%s4 + $0x118] sm:$0xff]
  %v1072 = vld [vmem:[%s4 + $0x120] sm:$0xff]
  %v1073 = vld [vmem:[%s4 + $0x128] sm:$0xff]
  %v1074 = vld [vmem:[%s4 + $0x130] sm:$0xff]
  %v1075 = vld [vmem:[%s4 + $0x138] sm:$0xff]
  %v1076 = vld [vmem:[%s4 + $0x140] sm:$0xff]
  %v1077 = vld [vmem:[%s4 + $0x148] sm:$0xff]
  %v1078 = vld [vmem:[%s4 + $0x150] sm:$0xff]
  %v1079 = vld [vmem:[%s4 + $0x158] sm:$0xff]
  %v1080 = vld [vmem:[%s4 + $0x160] sm:$0xff]
  %v1081 = vld [vmem:[%s4 + $0x168] sm:$0xff]
  %v1082 = vld [vmem:[%s4 + $0x170] sm:$0xff]
  %v1083 = vld [vmem:[%s4 + $0x178] sm:$0xff]
  %v1084 = vld [vmem:[%s4 + $0x180] sm:$0xff]
  %v1085 = vld [vmem:[%s4 + $0x188] sm:$0xff]
  %v1086 = vld [vmem:[%s4 + $0x190] sm:$0xff]
  %v1087 = vld [vmem:[%s4 + $0x198] sm:$0xff]
  %v1088 = vld [vmem:[%s4 + $0x1a0] sm:$0xff]
  %v1089 = vld [vmem:[%s4 + $0x1a8] sm:$0xff]
  %v1090 = vld [vmem:[%s4 + $0x1b0] sm:$0xff]
  %v1091 = vld [vmem:[%s4 + $0x1b8] sm:$0xff]
  %v1092 = vld [vmem:[%s4 + $0x1c0] sm:$0xff]
  %v1093 = vld [vmem:[%s4 + $0x1c8] sm:$0xff]
  %v1094 = vld [vmem:[%s4 + $0x1d0] sm:$0xff]
  %v1095 = vld [vmem:[%s4 + $0x1d8] sm:$0xff]
  %v1096 = vld [vmem:[%s4 + $0x1e0] sm:$0xff]
  %v1097 = vld [vmem:[%s4 + $0x1e8] sm:$0xff]
  %v1098 = vld [vmem:[%s4 + $0x1f0] sm:$0xff]
  %v1099 = vld [vmem:[%s4 + $0x1f8] sm:$0xff]
  %v1100 = vld [vmem:[%s4 + $0x200] sm:$0xff]
  %v1101 = vld [vmem:[%s4 + $0x208] sm:$0xff]
  %v1102 = vld [vmem:[%s4 + $0x210] sm:$0xff]
  %v1103 = vld [vmem:[%s4 + $0x218] sm:$0xff]
  %v1104 = vld [vmem:[%s4 + $0x220] sm:$0xff]
  %v1105 = vld [vmem:[%s4 + $0x228] sm:$0xff]
  %v1106 = vld [vmem:[%s4 + $0x230] sm:$0xff]
  %v1107 = vld [vmem:[%s4 + $0x238] sm:$0xff]
  %v1108 = vld [vmem:[%s4 + $0x240] sm:$0xff]
  %v1109 = vld [vmem:[%s4 + $0x248] sm:$0xff]
  %v1110 = vld [vmem:[%s4 + $0x250] sm:$0xff]
  %v1111 = vld [vmem:[%s4 + $0x258] sm:$0xff]
  %v1112 = vld [vmem:[%s4 + $0x260] sm:$0xff]
  %v1113 = vld [vmem:[%s4 + $0x268] sm:$0xff]
  %v1114 = vld [vmem:[%s4 + $0x270] sm:$0xff]
  %v1115 = vld [vmem:[%s4 + $0x278] sm:$0xff]
  %v1116 = vld [vmem:[%s4 + $0x280] sm:$0xff]
  %v1117 = vld [vmem:[%s4 + $0x288] sm:$0xff]
  %v1118 = vld [vmem:[%s4 + $0x290] sm:$0xff]
  %v1119 = vld [vmem:[%s4 + $0x298] sm:$0xff]
  %v1120 = vld [vmem:[%s4 + $0x2a0] sm:$0xff]
  %v1121 = vld [vmem:[%s4 + $0x2a8] sm:$0xff]
  %v1122 = vld [vmem:[%s4 + $0x2b0] sm:$0xff]
  %v1123 = vld [vmem:[%s4 + $0x2b8] sm:$0xff]
  %v1124 = vld [vmem:[%s4 + $0x2c0] sm:$0xff]
  %v1125 = vld [vmem:[%s4 + $0x2c8] sm:$0xff]
  %v1126 = vld [vmem:[%s4 + $0x2d0] sm:$0xff]
  %v1127 = vld [vmem:[%s4 + $0x2d8] sm:$0xff]
  %v1128 = vld [vmem:[%s4 + $0x2e0] sm:$0xff]
  %v1129 = vld [vmem:[%s4 + $0x2e8] sm:$0xff]
  %v1130 = vld [vmem:[%s4 + $0x2f0] sm:$0xff]
  %v1131 = vld [vmem:[%s4 + $0x2f8] sm:$0xff]
  %v1132 = vld [vmem:[%s4 + $0x300] sm:$0xff]
  %v1133 = vld [vmem:[%s4 + $0x308] sm:$0xff]
  %v1134 = vld [vmem:[%s4 + $0x310] sm:$0xff]
  %v1135 = vld [vmem:[%s4 + $0x318] sm:$0xff]
  %v1136 = vld [vmem:[%s4 + $0x320] sm:$0xff]
  %v1137 = vld [vmem:[%s4 + $0x328] sm:$0xff]
  %v1138 = vld [vmem:[%s4 + $0x330] sm:$0xff]
  %v1139 = vld [vmem:[%s4 + $0x338] sm:$0xff]
  %v1140 = vld [vmem:[%s4 + $0x340] sm:$0xff]
  %v1141 = vld [vmem:[%s4 + $0x348] sm:$0xff]
  %v1142 = vld [vmem:[%s4 + $0x350] sm:$0xff]
  %v1143 = vld [vmem:[%s4 + $0x358] sm:$0xff]
  %v1144 = vld [vmem:[%s4 + $0x360] sm:$0xff]
  %v1145 = vld [vmem:[%s4 + $0x368] sm:$0xff]
  %v1146 = vld [vmem:[%s4 + $0x370] sm:$0xff]
  %v1147 = vld [vmem:[%s4 + $0x378] sm:$0xff]
  %v1148 = vld [vmem:[%s4 + $0x380] sm:$0xff]
  %v1149 = vld [vmem:[%s4 + $0x388] sm:$0xff]
  %v1150 = vld [vmem:[%s4 + $0x390] sm:$0xff]
  %v1151 = vld [vmem:[%s4 + $0x398] sm:$0xff]
  %v1152 = vld [vmem:[%s4 + $0x3a0] sm:$0xff]
  %v1153 = vld [vmem:[%s4 + $0x3a8] sm:$0xff]
  %v1154 = vld [vmem:[%s4 + $0x3b0] sm:$0xff]
  %v1155 = vld [vmem:[%s4 + $0x3b8] sm:$0xff]
  %v1156 = vld [vmem:[%s4 + $0x3c0] sm:$0xff]
  %v1157 = vld [vmem:[%s4 + $0x3c8] sm:$0xff]
  %v1158 = vld [vmem:[%s4 + $0x3d0] sm:$0xff]
  %v1159 = vld [vmem:[%s4 + $0x3d8] sm:$0xff]
  %v1160 = vld [vmem:[%s4 + $0x3e0] sm:$0xff]
  %v1161 = vld [vmem:[%s4 + $0x3e8] sm:$0xff]
  %v1162 = vld [vmem:[%s4 + $0x3f0] sm:$0xff]
  %v1163 = vld [vmem:[%s4 + $0x3f8] sm:$0xff]
  %v1164 = vld [vmem:[%s5] sm:$0xf]
  %v1166 = vlaneseq
  %v1167 = vshrl.u32 %v1166, 7
  %v1168 = vsub.s32 0, %v1167
  %v1169 = vrot.slane %v1164, %v1168
  %v1170 = vlaneseq
  %v1171 = vshrl.u32 %v1170, 7
  %v1172 = vsub.s32 1, %v1171
  %v1173 = vrot.slane %v1164, %v1172
  %v1174 = vlaneseq
  %v1175 = vshrl.u32 %v1174, 7
  %v1176 = vsub.s32 2, %v1175
  %v1177 = vrot.slane %v1164, %v1176
  %v1178 = vlaneseq
  %v1179 = vshrl.u32 %v1178, 7
  %v1180 = vsub.s32 3, %v1179
  %v1181 = vrot.slane %v1164, %v1180
  %1186 = vmatprep.subr.mxu0 %v1037
  %1187 = vmatpush1.msra.mxu0 %v1036
  %1188 = vmatprep.subr.mxu0 %v1041
  %1189 = vmatpush1.msra.mxu0 %v1040
  %1190 = vmatprep.subr.mxu0 %v1045
  %1191 = vmatpush1.msra.mxu0 %v1044
  %1192 = vmatprep.subr.mxu0 %v1049
  %1193 = vmatpush1.msra.mxu0 %v1048
  %1194 = vmatprep.subr.mxu0 %v1053
  %1195 = vmatpush1.msra.mxu0 %v1052
  %1196 = vmatprep.subr.mxu0 %v1057
  %1197 = vmatpush1.msra.mxu0 %v1056
  %1198 = vmatprep.subr.mxu0 %v1061
  %1199 = vmatpush1.msra.mxu0 %v1060
  %1200 = vmatprep.subr.mxu0 %v1065
  %1201 = vmatpush1.msra.mxu0 %v1064
  %1202 = vmatprep.subr.mxu0 %v1069
  %1203 = vmatpush1.msra.mxu0 %v1068
  %1204 = vmatprep.subr.mxu0 %v1073
  %1205 = vmatpush1.msra.mxu0 %v1072
  %1206 = vmatprep.subr.mxu0 %v1077
  %1207 = vmatpush1.msra.mxu0 %v1076
  %1208 = vmatprep.subr.mxu0 %v1081
  %1209 = vmatpush1.msra.mxu0 %v1080
  %1210 = vmatprep.subr.mxu0 %v1085
  %1211 = vmatpush1.msra.mxu0 %v1084
  %1212 = vmatprep.subr.mxu0 %v1089
  %1213 = vmatpush1.msra.mxu0 %v1088
  %1214 = vmatprep.subr.mxu0 %v1093
  %1215 = vmatpush1.msra.mxu0 %v1092
  %1216 = vmatprep.subr.mxu0 %v1097
  %1217 = vmatpush1.msra.mxu0 %v1096
  %1218 = vmatprep.subr.mxu0 %v1101
  %1219 = vmatpush1.msra.mxu0 %v1100
  %1220 = vmatprep.subr.mxu0 %v1105
  %1221 = vmatpush1.msra.mxu0 %v1104
  %1222 = vmatprep.subr.mxu0 %v1109
  %1223 = vmatpush1.msra.mxu0 %v1108
  %1224 = vmatprep.subr.mxu0 %v1113
  %1225 = vmatpush1.msra.mxu0 %v1112
  %1226 = vmatprep.subr.mxu0 %v1117
  %1227 = vmatpush1.msra.mxu0 %v1116
  %1228 = vmatprep.subr.mxu0 %v1121
  %1229 = vmatpush1.msra.mxu0 %v1120
  %1230 = vmatprep.subr.mxu0 %v1125
  %1231 = vmatpush1.msra.mxu0 %v1124
  %1232 = vmatprep.subr.mxu0 %v1129
  %1233 = vmatpush1.msra.mxu0 %v1128
  %1234 = vmatprep.subr.mxu0 %v1133
  %1235 = vmatpush1.msra.mxu0 %v1132
  %1236 = vmatprep.subr.mxu0 %v1137
  %1237 = vmatpush1.msra.mxu0 %v1136
  %1238 = vmatprep.subr.mxu0 %v1141
  %1239 = vmatpush1.msra.mxu0 %v1140
  %1240 = vmatprep.subr.mxu0 %v1145
  %1241 = vmatpush1.msra.mxu0 %v1144
  %1242 = vmatprep.subr.mxu0 %v1149
  %1243 = vmatpush1.msra.mxu0 %v1148
  %1244 = vmatprep.subr.mxu0 %v1153
  %1245 = vmatpush1.msra.mxu0 %v1152
  %1246 = vmatprep.subr.mxu0 %v1157
  %1247 = vmatpush1.msra.mxu0 %v1156
  %1248 = vmatprep.subr.mxu0 %v1161
  %1249 = vmatpush1.msra.mxu0 %v1160
  %1250 = vmatprep.mubr.f32.mxu0 %v1035
  %1251 = vmatmul.mubr.f32.gmra.mrb[0].mxu0 %v1032
  %v1252 = vpop.f32.mrb[0].mxu0
  %v1253 = vadd.f32 %v1169, %v1252
  %v1254 = vpop.f32.mrb[0].mxu0
  %v1255 = vadd.f32 %v1173, %v1254
  %1256 = vdwg.mxu0
  %1257 = vmatprep.subr.mxu0 %v1039
  %1258 = vmatpush1.msra.mxu0 %v1038
  %1259 = vmatprep.subr.mxu0 %v1043
  %1260 = vmatpush1.msra.mxu0 %v1042
  %1261 = vmatprep.subr.mxu0 %v1047
  %1262 = vmatpush1.msra.mxu0 %v1046
  %1263 = vmatprep.subr.mxu0 %v1051
  %1264 = vmatpush1.msra.mxu0 %v1050
  %1265 = vmatprep.subr.mxu0 %v1055
  %1266 = vmatpush1.msra.mxu0 %v1054
  %1267 = vmatprep.subr.mxu0 %v1059
  %1268 = vmatpush1.msra.mxu0 %v1058
  %1269 = vmatprep.subr.mxu0 %v1063
  %1270 = vmatpush1.msra.mxu0 %v1062
  %1271 = vmatprep.subr.mxu0 %v1067
  %1272 = vmatpush1.msra.mxu0 %v1066
  %1273 = vmatprep.subr.mxu0 %v1071
  %1274 = vmatpush1.msra.mxu0 %v1070
  %1275 = vmatprep.subr.mxu0 %v1075
  %1276 = vmatpush1.msra.mxu0 %v1074
  %1277 = vmatprep.subr.mxu0 %v1079
  %1278 = vmatpush1.msra.mxu0 %v1078
  %1279 = vmatprep.subr.mxu0 %v1083
  %1280 = vmatpush1.msra.mxu0 %v1082
  %1281 = vmatprep.subr.mxu0 %v1087
  %1282 = vmatpush1.msra.mxu0 %v1086
  %1283 = vmatprep.subr.mxu0 %v1091
  %1284 = vmatpush1.msra.mxu0 %v1090
  %1285 = vmatprep.subr.mxu0 %v1095
  %1286 = vmatpush1.msra.mxu0 %v1094
  %1287 = vmatprep.subr.mxu0 %v1099
  %1288 = vmatpush1.msra.mxu0 %v1098
  %1289 = vmatprep.subr.mxu0 %v1103
  %1290 = vmatpush1.msra.mxu0 %v1102
  %1291 = vmatprep.subr.mxu0 %v1107
  %1292 = vmatpush1.msra.mxu0 %v1106
  %1293 = vmatprep.subr.mxu0 %v1111
  %1294 = vmatpush1.msra.mxu0 %v1110
  %1295 = vmatprep.subr.mxu0 %v1115
  %1296 = vmatpush1.msra.mxu0 %v1114
  %1297 = vmatprep.subr.mxu0 %v1119
  %1298 = vmatpush1.msra.mxu0 %v1118
  %1299 = vmatprep.subr.mxu0 %v1123
  %1300 = vmatpush1.msra.mxu0 %v1122
  %1301 = vmatprep.subr.mxu0 %v1127
  %1302 = vmatpush1.msra.mxu0 %v1126
  %1303 = vmatprep.subr.mxu0 %v1131
  %1304 = vmatpush1.msra.mxu0 %v1130
  %1305 = vmatprep.subr.mxu0 %v1135
  %1306 = vmatpush1.msra.mxu0 %v1134
  %1307 = vmatprep.subr.mxu0 %v1139
  %1308 = vmatpush1.msra.mxu0 %v1138
  %1309 = vmatprep.subr.mxu0 %v1143
  %1310 = vmatpush1.msra.mxu0 %v1142
  %1311 = vmatprep.subr.mxu0 %v1147
  %1312 = vmatpush1.msra.mxu0 %v1146
  %1313 = vmatprep.subr.mxu0 %v1151
  %1314 = vmatpush1.msra.mxu0 %v1150
  %1315 = vmatprep.subr.mxu0 %v1155
  %1316 = vmatpush1.msra.mxu0 %v1154
  %1317 = vmatprep.subr.mxu0 %v1159
  %1318 = vmatpush1.msra.mxu0 %v1158
  %1319 = vmatprep.subr.mxu0 %v1163
  %1320 = vmatpush1.msra.mxu0 %v1162
  %1321 = vmatprep.mubr.f32.mxu0 %v1035
  %1322 = vmatmul.mubr.f32.gmra.mrb[0].mxu0 %v1032
  %v1323 = vpop.f32.mrb[0].mxu0
  %v1324 = vadd.f32 %v1177, %v1323
  %v1325 = vpop.f32.mrb[0].mxu0
  %v1326 = vadd.f32 %v1181, %v1325
  %1327 = vdwg.mxu0
  %v1328 = vmax.f32 %v1253, 0.0
  %v1329 = vmax.f32 %v1255, 0.0
  %v1330 = vmax.f32 %v1324, 0.0
  %v1331 = vmax.f32 %v1326, 0.0
  %v1332 = vld [vmem:[%s6] sm:$0xff]
  %v1333 = vld [vmem:[%s6 + $0x8] sm:$0xff]
  %v1334 = vld [vmem:[%s6 + $0x10] sm:$0xff]
  %v1335 = vld [vmem:[%s6 + $0x18] sm:$0xff]
  %v1336 = vld [vmem:[%s6 + $0x20] sm:$0xff]
  %v1337 = vld [vmem:[%s6 + $0x28] sm:$0xff]
  %v1338 = vld [vmem:[%s6 + $0x30] sm:$0xff]
  %v1339 = vld [vmem:[%s6 + $0x38] sm:$0xff]
  %v1340 = vld [vmem:[%s6 + $0x40] sm:$0xff]
  %v1341 = vld [vmem:[%s6 + $0x48] sm:$0xff]
  %v1342 = vld [vmem:[%s6 + $0x50] sm:$0xff]
  %v1343 = vld [vmem:[%s6 + $0x58] sm:$0xff]
  %v1344 = vld [vmem:[%s6 + $0x60] sm:$0xff]
  %v1345 = vld [vmem:[%s6 + $0x68] sm:$0xff]
  %v1346 = vld [vmem:[%s6 + $0x70] sm:$0xff]
  %v1347 = vld [vmem:[%s6 + $0x78] sm:$0xff]
  %v1348 = vld [vmem:[%s6 + $0x80] sm:$0xff]
  %v1349 = vld [vmem:[%s6 + $0x88] sm:$0xff]
  %v1350 = vld [vmem:[%s6 + $0x90] sm:$0xff]
  %v1351 = vld [vmem:[%s6 + $0x98] sm:$0xff]
  %v1352 = vld [vmem:[%s6 + $0xa0] sm:$0xff]
  %v1353 = vld [vmem:[%s6 + $0xa8] sm:$0xff]
  %v1354 = vld [vmem:[%s6 + $0xb0] sm:$0xff]
  %v1355 = vld [vmem:[%s6 + $0xb8] sm:$0xff]
  %v1356 = vld [vmem:[%s6 + $0xc0] sm:$0xff]
  %v1357 = vld [vmem:[%s6 + $0xc8] sm:$0xff]
  %v1358 = vld [vmem:[%s6 + $0xd0] sm:$0xff]
  %v1359 = vld [vmem:[%s6 + $0xd8] sm:$0xff]
  %v1360 = vld [vmem:[%s6 + $0xe0] sm:$0xff]
  %v1361 = vld [vmem:[%s6 + $0xe8] sm:$0xff]
  %v1362 = vld [vmem:[%s6 + $0xf0] sm:$0xff]
  %v1363 = vld [vmem:[%s6 + $0xf8] sm:$0xff]
  %v1364 = vld [vmem:[%s6 + $0x100] sm:$0xff]
  %v1365 = vld [vmem:[%s6 + $0x108] sm:$0xff]
  %v1366 = vld [vmem:[%s6 + $0x110] sm:$0xff]
  %v1367 = vld [vmem:[%s6 + $0x118] sm:$0xff]
  %v1368 = vld [vmem:[%s6 + $0x120] sm:$0xff]
  %v1369 = vld [vmem:[%s6 + $0x128] sm:$0xff]
  %v1370 = vld [vmem:[%s6 + $0x130] sm:$0xff]
  %v1371 = vld [vmem:[%s6 + $0x138] sm:$0xff]
  %v1372 = vld [vmem:[%s6 + $0x140] sm:$0xff]
  %v1373 = vld [vmem:[%s6 + $0x148] sm:$0xff]
  %v1374 = vld [vmem:[%s6 + $0x150] sm:$0xff]
  %v1375 = vld [vmem:[%s6 + $0x158] sm:$0xff]
  %v1376 = vld [vmem:[%s6 + $0x160] sm:$0xff]
  %v1377 = vld [vmem:[%s6 + $0x168] sm:$0xff]
  %v1378 = vld [vmem:[%s6 + $0x170] sm:$0xff]
  %v1379 = vld [vmem:[%s6 + $0x178] sm:$0xff]
  %v1380 = vld [vmem:[%s6 + $0x180] sm:$0xff]
  %v1381 = vld [vmem:[%s6 + $0x188] sm:$0xff]
  %v1382 = vld [vmem:[%s6 + $0x190] sm:$0xff]
  %v1383 = vld [vmem:[%s6 + $0x198] sm:$0xff]
  %v1384 = vld [vmem:[%s6 + $0x1a0] sm:$0xff]
  %v1385 = vld [vmem:[%s6 + $0x1a8] sm:$0xff]
  %v1386 = vld [vmem:[%s6 + $0x1b0] sm:$0xff]
  %v1387 = vld [vmem:[%s6 + $0x1b8] sm:$0xff]
  %v1388 = vld [vmem:[%s6 + $0x1c0] sm:$0xff]
  %v1389 = vld [vmem:[%s6 + $0x1c8] sm:$0xff]
  %v1390 = vld [vmem:[%s6 + $0x1d0] sm:$0xff]
  %v1391 = vld [vmem:[%s6 + $0x1d8] sm:$0xff]
  %v1392 = vld [vmem:[%s6 + $0x1e0] sm:$0xff]
  %v1393 = vld [vmem:[%s6 + $0x1e8] sm:$0xff]
  %v1394 = vld [vmem:[%s6 + $0x1f0] sm:$0xff]
  %v1395 = vld [vmem:[%s6 + $0x1f8] sm:$0xff]
  %v1396 = vld [vmem:[%s7] sm:$0x1]
  %v1398 = vlaneseq
  %v1399 = vshrl.u32 %v1398, 7
  %v1400 = vsub.s32 0, %v1399
  %v1401 = vrot.slane %v1396, %v1400
  %1403 = vmatprep.subr.mxu0 0.0
  %1404 = vmatpush1.msra.mxu0 %v1332
  %1405 = vmatprep.subr.mxu0 0.0
  %1406 = vmatpush1.msra.mxu0 %v1333
  %1407 = vmatprep.subr.mxu0 0.0
  %1408 = vmatpush1.msra.mxu0 %v1334
  %1409 = vmatprep.subr.mxu0 0.0
  %1410 = vmatpush1.msra.mxu0 %v1335
  %1411 = vmatprep.subr.mxu0 0.0
  %1412 = vmatpush1.msra.mxu0 %v1336
  %1413 = vmatprep.subr.mxu0 0.0
  %1414 = vmatpush1.msra.mxu0 %v1337
  %1415 = vmatprep.subr.mxu0 0.0
  %1416 = vmatpush1.msra.mxu0 %v1338
  %1417 = vmatprep.subr.mxu0 0.0
  %1418 = vmatpush1.msra.mxu0 %v1339
  %1419 = vmatprep.subr.mxu0 0.0
  %1420 = vmatpush1.msra.mxu0 %v1340
  %1421 = vmatprep.subr.mxu0 0.0
  %1422 = vmatpush1.msra.mxu0 %v1341
  %1423 = vmatprep.subr.mxu0 0.0
  %1424 = vmatpush1.msra.mxu0 %v1342
  %1425 = vmatprep.subr.mxu0 0.0
  %1426 = vmatpush1.msra.mxu0 %v1343
  %1427 = vmatprep.subr.mxu0 0.0
  %1428 = vmatpush1.msra.mxu0 %v1344
  %1429 = vmatprep.subr.mxu0 0.0
  %1430 = vmatpush1.msra.mxu0 %v1345
  %1431 = vmatprep.subr.mxu0 0.0
  %1432 = vmatpush1.msra.mxu0 %v1346
  %1433 = vmatprep.subr.mxu0 0.0
  %1434 = vmatpush1.msra.mxu0 %v1347
  %1435 = vmatprep.subr.mxu0 0.0
  %1436 = vmatpush1.msra.mxu0 %v1348
  %1437 = vmatprep.subr.mxu0 0.0
  %1438 = vmatpush1.msra.mxu0 %v1349
  %1439 = vmatprep.subr.mxu0 0.0
  %1440 = vmatpush1.msra.mxu0 %v1350
  %1441 = vmatprep.subr.mxu0 0.0
  %1442 = vmatpush1.msra.mxu0 %v1351
  %1443 = vmatprep.subr.mxu0 0.0
  %1444 = vmatpush1.msra.mxu0 %v1352
  %1445 = vmatprep.subr.mxu0 0.0
  %1446 = vmatpush1.msra.mxu0 %v1353
  %1447 = vmatprep.subr.mxu0 0.0
  %1448 = vmatpush1.msra.mxu0 %v1354
  %1449 = vmatprep.subr.mxu0 0.0
  %1450 = vmatpush1.msra.mxu0 %v1355
  %1451 = vmatprep.subr.mxu0 0.0
  %1452 = vmatpush1.msra.mxu0 %v1356
  %1453 = vmatprep.subr.mxu0 0.0
  %1454 = vmatpush1.msra.mxu0 %v1357
  %1455 = vmatprep.subr.mxu0 0.0
  %1456 = vmatpush1.msra.mxu0 %v1358
  %1457 = vmatprep.subr.mxu0 0.0
  %1458 = vmatpush1.msra.mxu0 %v1359
  %1459 = vmatprep.subr.mxu0 0.0
  %1460 = vmatpush1.msra.mxu0 %v1360
  %1461 = vmatprep.subr.mxu0 0.0
  %1462 = vmatpush1.msra.mxu0 %v1361
  %1463 = vmatprep.subr.mxu0 0.0
  %1464 = vmatpush1.msra.mxu0 %v1362
  %1465 = vmatprep.subr.mxu0 0.0
  %1466 = vmatpush1.msra.mxu0 %v1363
  %1467 = vmatprep.mubr.f32.mxu0 %v1329
  %1468 = vmatmul.mubr.f32.gmra.mrb[0].mxu0 %v1328
  %v1469 = vpop.f32.mrb[0].mxu0
  %v1470 = vadd.f32 %v1401, %v1469
  %v1471 = vpop.f32.mrb[0].mxu0
  %1472 = vdwg.mxu0
  %1473 = vmatprep.subr.mxu0 0.0
  %1474 = vmatpush1.msra.mxu0 %v1364
  %1475 = vmatprep.subr.mxu0 0.0
  %1476 = vmatpush1.msra.mxu0 %v1365
  %1477 = vmatprep.subr.mxu0 0.0
  %1478 = vmatpush1.msra.mxu0 %v1366
  %1479 = vmatprep.subr.mxu0 0.0
  %1480 = vmatpush1.msra.mxu0 %v1367
  %1481 = vmatprep.subr.mxu0 0.0
  %1482 = vmatpush1.msra.mxu0 %v1368
  %1483 = vmatprep.subr.mxu0 0.0
  %1484 = vmatpush1.msra.mxu0 %v1369
  %1485 = vmatprep.subr.mxu0 0.0
  %1486 = vmatpush1.msra.mxu0 %v1370
  %1487 = vmatprep.subr.mxu0 0.0
  %1488 = vmatpush1.msra.mxu0 %v1371
  %1489 = vmatprep.subr.mxu0 0.0
  %1490 = vmatpush1.msra.mxu0 %v1372
  %1491 = vmatprep.subr.mxu0 0.0
  %1492 = vmatpush1.msra.mxu0 %v1373
  %1493 = vmatprep.subr.mxu0 0.0
  %1494 = vmatpush1.msra.mxu0 %v1374
  %1495 = vmatprep.subr.mxu0 0.0
  %1496 = vmatpush1.msra.mxu0 %v1375
  %1497 = vmatprep.subr.mxu0 0.0
  %1498 = vmatpush1.msra.mxu0 %v1376
  %1499 = vmatprep.subr.mxu0 0.0
  %1500 = vmatpush1.msra.mxu0 %v1377
  %1501 = vmatprep.subr.mxu0 0.0
  %1502 = vmatpush1.msra.mxu0 %v1378
  %1503 = vmatprep.subr.mxu0 0.0
  %1504 = vmatpush1.msra.mxu0 %v1379
  %1505 = vmatprep.subr.mxu0 0.0
  %1506 = vmatpush1.msra.mxu0 %v1380
  %1507 = vmatprep.subr.mxu0 0.0
  %1508 = vmatpush1.msra.mxu0 %v1381
  %1509 = vmatprep.subr.mxu0 0.0
  %1510 = vmatpush1.msra.mxu0 %v1382
  %1511 = vmatprep.subr.mxu0 0.0
  %1512 = vmatpush1.msra.mxu0 %v1383
  %1513 = vmatprep.subr.mxu0 0.0
  %1514 = vmatpush1.msra.mxu0 %v1384
  %1515 = vmatprep.subr.mxu0 0.0
  %1516 = vmatpush1.msra.mxu0 %v1385
  %1517 = vmatprep.subr.mxu0 0.0
  %1518 = vmatpush1.msra.mxu0 %v1386
  %1519 = vmatprep.subr.mxu0 0.0
  %1520 = vmatpush1.msra.mxu0 %v1387
  %1521 = vmatprep.subr.mxu0 0.0
  %1522 = vmatpush1.msra.mxu0 %v1388
  %1523 = vmatprep.subr.mxu0 0.0
  %1524 = vmatpush1.msra.mxu0 %v1389
  %1525 = vmatprep.subr.mxu0 0.0
  %1526 = vmatpush1.msra.mxu0 %v1390
  %1527 = vmatprep.subr.mxu0 0.0
  %1528 = vmatpush1.msra.mxu0 %v1391
  %1529 = vmatprep.subr.mxu0 0.0
  %1530 = vmatpush1.msra.mxu0 %v1392
  %1531 = vmatprep.subr.mxu0 0.0
  %1532 = vmatpush1.msra.mxu0 %v1393
  %1533 = vmatprep.subr.mxu0 0.0
  %1534 = vmatpush1.msra.mxu0 %v1394
  %1535 = vmatprep.subr.mxu0 0.0
  %1536 = vmatpush1.msra.mxu0 %v1395
  %1537 = vmatprep.mubr.f32.mxu0 %v1331
  %1538 = vmatmul.mubr.f32.gmra.mrb[0].mxu0 %v1330
  %v1539 = vpop.f32.mrb[0].mxu0
  %v1540 = vadd.f32 %v1470, %v1539
  %v1541 = vpop.f32.mrb[0].mxu0
  %1542 = vdwg.mxu0
  %1543 = vst [vmem:[%s8] sm:$0xff] %v1540
  // Predicated region
  $region34: #{lstm_model.1} parent=0 // pred_check
    _
  $region35: #{lstm_model.1} parent=0 // pred_check_branch
    %1545 = sbr.rel (0) target = $region37
  $region36: #{lstm_model.1} parent=0 // pred_region
    _
  $region37: #{lstm_model.1} parent=0 // pred_fallthru
    _
  // Predicated region
  $region38: #{lstm_model.1} parent=0 // pred_check
    _
  $region39: #{lstm_model.1} parent=0 // pred_check_branch
    %1547 = sbr.rel (0) target = $region41
  $region40: #{lstm_model.1} parent=0 // pred_region
    _
  $region41: #{lstm_model.1} parent=0 // pred_fallthru
    _

</llo_original>
